<compile_context>
chip_gen: v6e
topology: v6e:2x2x1
jax: 0.10.0
libtpu: 0.0.40
codegen_flags: <defaults>
</compile_context>

<pallas_src>
import jax
import jax.numpy as jnp
from jax.experimental import pallas as pl
from jax.experimental.pallas import tpu as pltpu


def _round_up(x, m):
    return (x + m - 1) // m * m


def mlp_kernel(x_ref,
               w1_ref, b1_ref,
               w2_ref, b2_ref,
               w3_ref, b3_ref,
               w4_ref, b4_ref,
               out_ref):
    # All four matmuls feed the MXU with bf16 operands and accumulate in f32.
    h = jnp.dot(x_ref[...], w1_ref[...], preferred_element_type=jnp.float32)
    h = jnp.maximum(h + b1_ref[...], 0.0)
    h = jnp.dot(h.astype(jnp.bfloat16), w2_ref[...],
                preferred_element_type=jnp.float32)
    h = jnp.maximum(h + b2_ref[...], 0.0)
    h = jnp.dot(h.astype(jnp.bfloat16), w3_ref[...],
                preferred_element_type=jnp.float32)
    h = jnp.maximum(h + b3_ref[...], 0.0)
    logits = jnp.dot(h.astype(jnp.bfloat16), w4_ref[...],
                     preferred_element_type=jnp.float32) + b4_ref[...]
    # Numerically stable log-softmax over the class axis (torch dim=1).
    m = jnp.max(logits, axis=-1, keepdims=True)
    shifted = logits - m
    lse = jnp.log(jnp.sum(jnp.exp(shifted), axis=-1, keepdims=True))
    out_ref[...] = (shifted - lse).astype(out_ref.dtype)


def simple_mlp_forward(x_nchw, params, *, block_m=256):
    """x_nchw: (B, 1, 28, 28) float. params: dict of f32 weights/biases."""
    B = x_nchw.shape[0]
    x = x_nchw.reshape(B, -1).astype(jnp.float32)   # torch .view(B, -1)
    K = x.shape[1]
    K_pad = _round_up(K, 128)                       # 784 -> 896 lane/K alignment

    # Batch tile: multiple of 8 (f32 sublanes), up to block_m rows per tile.
    TM = block_m if B >= block_m else _round_up(max(B, 1), 8)
    B_pad = _round_up(B, TM)

    # Zero-pad batch tail + feature dim; cast streamed x and resident weights
    # to bf16 for the MXU (halves DMA bytes); biases stay f32 for the VPU add.
    x_p = jnp.pad(x, ((0, B_pad - B), (0, K_pad - K))).astype(jnp.bfloat16)
    w1 = jnp.pad(params["w1"], ((0, K_pad - K), (0, 0))).astype(jnp.bfloat16)
    w2 = params["w2"].astype(jnp.bfloat16)
    w3 = params["w3"].astype(jnp.bfloat16)
    w4 = params["w4"].astype(jnp.bfloat16)
    b1, b2, b3, b4 = (params["b1"], params["b2"], params["b3"], params["b4"])

    H1, H2, H3, out_size = w1.shape[1], w2.shape[1], w3.shape[1], w4.shape[1]
    grid = (B_pad // TM,)

    operands = (x_p, w1, b1, w2, b2, w3, b3, w4, b4)
    weight_bytes = sum(int(a.size) * a.dtype.itemsize for a in operands[1:])
    tile_bytes = (2 * TM * K_pad * 2              # bf16 x tile, double-buffered
                  + 2 * TM * out_size * 4         # f32 out tile, double-buffered
                  + 4 * TM * max(H1, H2, H3) * 4)  # f32 intermediates headroom
    vmem_limit = int(min(4 * (weight_bytes + tile_bytes) + (8 << 20), 32 << 20))

    flops = 2 * B_pad * (K_pad * H1 + H1 * H2 + H2 * H3 + H3 * out_size)
    bytes_accessed = (int(x_p.size) * 2 + weight_bytes + B_pad * out_size * 4)
    cost = pl.CostEstimate(flops=flops,
                           transcendentals=B_pad * out_size,
                           bytes_accessed=bytes_accessed)

    const = lambda i: (0, 0)   # weights/biases: same block every grid step -> VMEM-resident
    out_p = pl.pallas_call(
        mlp_kernel,
        out_shape=jax.ShapeDtypeStruct((B_pad, out_size), jnp.float32),
        grid=grid,
        in_specs=[
            pl.BlockSpec((TM, K_pad), lambda i: (i, 0)),   # streamed x tile
            pl.BlockSpec((K_pad, H1), const),
            pl.BlockSpec((1, H1), const),
            pl.BlockSpec((H1, H2), const),
            pl.BlockSpec((1, H2), const),
            pl.BlockSpec((H2, H3), const),
            pl.BlockSpec((1, H3), const),
            pl.BlockSpec((H3, out_size), const),
            pl.BlockSpec((1, out_size), const),
        ],
        out_specs=pl.BlockSpec((TM, out_size), lambda i: (i, 0)),
        compiler_params=pltpu.CompilerParams(
            dimension_semantics=("parallel",),
            vmem_limit_bytes=vmem_limit,
        ),
        cost_estimate=cost,
    )(x_p, w1, b1, w2, b2, w3, b3, w4, b4)
    return out_p[:B]


def init_params(key, input_size=28 * 28, hidden_layers=(256, 256, 256), output_size=10):
    """Deterministic init mimicking torch.nn.Linear default U(-1/sqrt(fan_in), +)."""
    sizes = [input_size] + list(hidden_layers) + [output_size]
    params = {}
    for i in range(len(sizes) - 1):
        fan_in, fan_out = sizes[i], sizes[i + 1]
        key, kw, kb = jax.random.split(key, 3)
        bound = 1.0 / jnp.sqrt(fan_in)
        params[f"w{i + 1}"] = jax.random.uniform(
            kw, (fan_in, fan_out), jnp.float32, -bound, bound)
        params[f"b{i + 1}"] = jax.random.uniform(
            kb, (1, fan_out), jnp.float32, -bound, bound)
    return params


def reference_forward(x_nchw, params, matmul_dtype=jnp.float32):
    """Pure-JAX reference. matmul_dtype=bfloat16 mirrors the kernel's MXU dtype."""
    h = x_nchw.reshape(x_nchw.shape[0], -1).astype(jnp.float32)

    def dense(a, w, b):
        return jnp.dot(a.astype(matmul_dtype), w.astype(matmul_dtype),
                       preferred_element_type=jnp.float32) + b

    h = jnp.maximum(dense(h, params["w1"], params["b1"]), 0.0)
    h = jnp.maximum(dense(h, params["w2"], params["b2"]), 0.0)
    h = jnp.maximum(dense(h, params["w3"], params["b3"]), 0.0)
    logits = dense(h, params["w4"], params["b4"])
    return jax.nn.log_softmax(logits, axis=1)


if __name__ == "__main__":
    key = jax.random.PRNGKey(0)
    key, kx = jax.random.split(key)
    params = init_params(key)

    # Small MNIST-like NCHW input (single tile, padded batch).
    x_small = jax.random.normal(kx, (2, 1, 28, 28), dtype=jnp.float32)
    out_small = jax.block_until_ready(simple_mlp_forward(x_small, params))
    assert out_small.shape == (2, 10)
    ref_bf16 = reference_forward(x_small, params, matmul_dtype=jnp.bfloat16)
    ref_f32 = reference_forward(x_small, params, matmul_dtype=jnp.float32)
    assert jnp.allclose(out_small, ref_bf16, atol=2e-3, rtol=2e-3)
    assert jnp.allclose(out_small, ref_f32, atol=1e-1, rtol=1e-1)

    # Larger batch exercises the batch grid (2 tiles + tail padding).
    key, kx2 = jax.random.split(key)
    x_big = jax.random.normal(kx2, (300, 1, 28, 28), dtype=jnp.float32)
    out_big = jax.block_until_ready(simple_mlp_forward(x_big, params))
    assert out_big.shape == (300, 10)
    ref_big = reference_forward(x_big, params, matmul_dtype=jnp.bfloat16)
    assert jnp.allclose(out_big, ref_big, atol=2e-3, rtol=2e-3)

    print("KERNEL_OK")
</pallas_src>

<mosaic_0001>
module attributes {stable_mosaic.version = 11 : i64} {
  func.func @mlp_kernel(%arg0: i32, %arg1: memref<8x896xbf16, #tpu.memory_space<vmem>>, %arg2: memref<896x256xbf16, #tpu.memory_space<vmem>>, %arg3: memref<1x256xf32, #tpu.memory_space<vmem>>, %arg4: memref<256x256xbf16, #tpu.memory_space<vmem>>, %arg5: memref<1x256xf32, #tpu.memory_space<vmem>>, %arg6: memref<256x256xbf16, #tpu.memory_space<vmem>>, %arg7: memref<1x256xf32, #tpu.memory_space<vmem>>, %arg8: memref<256x10xbf16, #tpu.memory_space<vmem>>, %arg9: memref<1x10xf32, #tpu.memory_space<vmem>>, %arg10: memref<8x10xf32, #tpu.memory_space<vmem>>) attributes {dimension_semantics = [#tpu.dimension_semantics<parallel>], iteration_bounds = array<i64: 1>, scalar_prefetch = 0 : i64, scratch_operands = 0 : i64, tpu.core_type = #tpu.core_type<tc>, window_params = [{transform_indices = @transform_0, window_bounds = array<i64: 8, 896>}, {pipeline_mode = #tpu.pipeline_mode<synchronous>, transform_indices = @transform_1, window_bounds = array<i64: 896, 256>}, {pipeline_mode = #tpu.pipeline_mode<synchronous>, transform_indices = @transform_2, window_bounds = array<i64: 1, 256>}, {pipeline_mode = #tpu.pipeline_mode<synchronous>, transform_indices = @transform_3, window_bounds = array<i64: 256, 256>}, {pipeline_mode = #tpu.pipeline_mode<synchronous>, transform_indices = @transform_4, window_bounds = array<i64: 1, 256>}, {pipeline_mode = #tpu.pipeline_mode<synchronous>, transform_indices = @transform_5, window_bounds = array<i64: 256, 256>}, {pipeline_mode = #tpu.pipeline_mode<synchronous>, transform_indices = @transform_6, window_bounds = array<i64: 1, 256>}, {pipeline_mode = #tpu.pipeline_mode<synchronous>, transform_indices = @transform_7, window_bounds = array<i64: 256, 10>}, {pipeline_mode = #tpu.pipeline_mode<synchronous>, transform_indices = @transform_8, window_bounds = array<i64: 1, 10>}, {transform_indices = @transform_9, window_bounds = array<i64: 8, 10>}]} {
    %c0 = arith.constant 0 : index
    %c0_0 = arith.constant 0 : index
    %0 = vector.load %arg1[%c0, %c0_0] : memref<8x896xbf16, #tpu.memory_space<vmem>>, vector<8x896xbf16>
    %c0_1 = arith.constant 0 : index
    %c0_2 = arith.constant 0 : index
    %1 = vector.load %arg2[%c0_1, %c0_2] : memref<896x256xbf16, #tpu.memory_space<vmem>>, vector<896x256xbf16>
    %cst = arith.constant dense<0.000000e+00> : vector<8x256xf32>
    %2 = tpu.matmul %0, %1, %cst {dimension_numbers = #tpu.dot_dimension_numbers<[1], [0], [0], [1], [0, 0, 1, 1], [], []>} : vector<8x896xbf16>, vector<896x256xbf16>, vector<8x256xf32> -> vector<8x256xf32>
    %c0_3 = arith.constant 0 : index
    %c0_4 = arith.constant 0 : index
    %3 = vector.load %arg3[%c0_3, %c0_4] : memref<1x256xf32, #tpu.memory_space<vmem>>, vector<1x256xf32>
    %4 = vector.broadcast %3 : vector<1x256xf32> to vector<8x256xf32>
    %5 = arith.addf %2, %4 : vector<8x256xf32>
    %cst_5 = arith.constant 0.000000e+00 : f32
    %6 = vector.broadcast %cst_5 : f32 to vector<8x256xf32>
    %7 = arith.maximumf %5, %6 : vector<8x256xf32>
    %8 = arith.truncf %7 : vector<8x256xf32> to vector<8x256xbf16>
    %c0_6 = arith.constant 0 : index
    %c0_7 = arith.constant 0 : index
    %9 = vector.load %arg4[%c0_6, %c0_7] : memref<256x256xbf16, #tpu.memory_space<vmem>>, vector<256x256xbf16>
    %cst_8 = arith.constant dense<0.000000e+00> : vector<8x256xf32>
    %10 = tpu.matmul %8, %9, %cst_8 {dimension_numbers = #tpu.dot_dimension_numbers<[1], [0], [0], [1], [0, 0, 1, 1], [], []>} : vector<8x256xbf16>, vector<256x256xbf16>, vector<8x256xf32> -> vector<8x256xf32>
    %c0_9 = arith.constant 0 : index
    %c0_10 = arith.constant 0 : index
    %11 = vector.load %arg5[%c0_9, %c0_10] : memref<1x256xf32, #tpu.memory_space<vmem>>, vector<1x256xf32>
    %12 = vector.broadcast %11 : vector<1x256xf32> to vector<8x256xf32>
    %13 = arith.addf %10, %12 : vector<8x256xf32>
    %cst_11 = arith.constant 0.000000e+00 : f32
    %14 = vector.broadcast %cst_11 : f32 to vector<8x256xf32>
    %15 = arith.maximumf %13, %14 : vector<8x256xf32>
    %16 = arith.truncf %15 : vector<8x256xf32> to vector<8x256xbf16>
    %c0_12 = arith.constant 0 : index
    %c0_13 = arith.constant 0 : index
    %17 = vector.load %arg6[%c0_12, %c0_13] : memref<256x256xbf16, #tpu.memory_space<vmem>>, vector<256x256xbf16>
    %cst_14 = arith.constant dense<0.000000e+00> : vector<8x256xf32>
    %18 = tpu.matmul %16, %17, %cst_14 {dimension_numbers = #tpu.dot_dimension_numbers<[1], [0], [0], [1], [0, 0, 1, 1], [], []>} : vector<8x256xbf16>, vector<256x256xbf16>, vector<8x256xf32> -> vector<8x256xf32>
    %c0_15 = arith.constant 0 : index
    %c0_16 = arith.constant 0 : index
    %19 = vector.load %arg7[%c0_15, %c0_16] : memref<1x256xf32, #tpu.memory_space<vmem>>, vector<1x256xf32>
    %20 = vector.broadcast %19 : vector<1x256xf32> to vector<8x256xf32>
    %21 = arith.addf %18, %20 : vector<8x256xf32>
    %cst_17 = arith.constant 0.000000e+00 : f32
    %22 = vector.broadcast %cst_17 : f32 to vector<8x256xf32>
    %23 = arith.maximumf %21, %22 : vector<8x256xf32>
    %24 = arith.truncf %23 : vector<8x256xf32> to vector<8x256xbf16>
    %c0_18 = arith.constant 0 : index
    %c0_19 = arith.constant 0 : index
    %25 = vector.load %arg8[%c0_18, %c0_19] : memref<256x10xbf16, #tpu.memory_space<vmem>>, vector<256x10xbf16>
    %cst_20 = arith.constant dense<0.000000e+00> : vector<8x10xf32>
    %26 = tpu.matmul %24, %25, %cst_20 {dimension_numbers = #tpu.dot_dimension_numbers<[1], [0], [0], [1], [0, 0, 1, 1], [], []>} : vector<8x256xbf16>, vector<256x10xbf16>, vector<8x10xf32> -> vector<8x10xf32>
    %c0_21 = arith.constant 0 : index
    %c0_22 = arith.constant 0 : index
    %27 = vector.load %arg9[%c0_21, %c0_22] : memref<1x10xf32, #tpu.memory_space<vmem>>, vector<1x10xf32>
    %28 = vector.broadcast %27 : vector<1x10xf32> to vector<8x10xf32>
    %29 = arith.addf %26, %28 : vector<8x10xf32>
    %cst_23 = arith.constant dense<0xFF800000> : vector<8xf32>
    %30 = vector.multi_reduction <maximumf>, %29, %cst_23 [1] : vector<8x10xf32> to vector<8xf32>
    %31 = vector.shape_cast %30 : vector<8xf32> to vector<8x1xf32>
    %32 = vector.broadcast %31 : vector<8x1xf32> to vector<8x10xf32>
    %33 = arith.subf %29, %32 : vector<8x10xf32>
    %34 = math.exp %33 : vector<8x10xf32>
    %cst_24 = arith.constant dense<0.000000e+00> : vector<8xf32>
    %35 = vector.multi_reduction <add>, %34, %cst_24 [1] : vector<8x10xf32> to vector<8xf32>
    %36 = vector.shape_cast %35 : vector<8xf32> to vector<8x1xf32>
    %37 = math.log %36 : vector<8x1xf32>
    %38 = vector.broadcast %37 : vector<8x1xf32> to vector<8x10xf32>
    %39 = arith.subf %33, %38 : vector<8x10xf32>
    %c0_25 = arith.constant 0 : index
    %c0_26 = arith.constant 0 : index
    %40 = vector.load %arg10[%c0_25, %c0_26] : memref<8x10xf32, #tpu.memory_space<vmem>>, vector<8x10xf32>
    tpu.vector_store %arg10[%c0_25, %c0_26], %39 {strides = array<i32>} : memref<8x10xf32, #tpu.memory_space<vmem>>, vector<8x10xf32>,
    return
  }
  func.func @transform_0(%arg0: i32) -> (i32, i32) {
    %c0_i32 = arith.constant 0 : i32
    %c0_i32_0 = arith.constant 0 : i32
    return %arg0, %c0_i32 : i32, i32
  }
  func.func @transform_1(%arg0: i32) -> (i32, i32) {
    %c0_i32 = arith.constant 0 : i32
    %c0_i32_0 = arith.constant 0 : i32
    %c0_i32_1 = arith.constant 0 : i32
    return %c0_i32, %c0_i32_0 : i32, i32
  }
  func.func @transform_2(%arg0: i32) -> (i32, i32) {
    %c0_i32 = arith.constant 0 : i32
    %c0_i32_0 = arith.constant 0 : i32
    %c0_i32_1 = arith.constant 0 : i32
    return %c0_i32, %c0_i32_0 : i32, i32
  }
  func.func @transform_3(%arg0: i32) -> (i32, i32) {
    %c0_i32 = arith.constant 0 : i32
    %c0_i32_0 = arith.constant 0 : i32
    %c0_i32_1 = arith.constant 0 : i32
    return %c0_i32, %c0_i32_0 : i32, i32
  }
  func.func @transform_4(%arg0: i32) -> (i32, i32) {
    %c0_i32 = arith.constant 0 : i32
    %c0_i32_0 = arith.constant 0 : i32
    %c0_i32_1 = arith.constant 0 : i32
    return %c0_i32, %c0_i32_0 : i32, i32
  }
  func.func @transform_5(%arg0: i32) -> (i32, i32) {
    %c0_i32 = arith.constant 0 : i32
    %c0_i32_0 = arith.constant 0 : i32
    %c0_i32_1 = arith.constant 0 : i32
    return %c0_i32, %c0_i32_0 : i32, i32
  }
  func.func @transform_6(%arg0: i32) -> (i32, i32) {
    %c0_i32 = arith.constant 0 : i32
    %c0_i32_0 = arith.constant 0 : i32
    %c0_i32_1 = arith.constant 0 : i32
    return %c0_i32, %c0_i32_0 : i32, i32
  }
  func.func @transform_7(%arg0: i32) -> (i32, i32) {
    %c0_i32 = arith.constant 0 : i32
    %c0_i32_0 = arith.constant 0 : i32
    %c0_i32_1 = arith.constant 0 : i32
    return %c0_i32, %c0_i32_0 : i32, i32
  }
  func.func @transform_8(%arg0: i32) -> (i32, i32) {
    %c0_i32 = arith.constant 0 : i32
    %c0_i32_0 = arith.constant 0 : i32
    %c0_i32_1 = arith.constant 0 : i32
    return %c0_i32, %c0_i32_0 : i32, i32
  }
  func.func @transform_9(%arg0: i32) -> (i32, i32) {
    %c0_i32 = arith.constant 0 : i32
    %c0_i32_0 = arith.constant 0 : i32
    return %arg0, %c0_i32 : i32, i32
  }
}

</mosaic_0001>

<llo_original>
// kernel: tpu_custom_call.1
$region0: #{tpu_custom_call.1}
  #allocation0 [shape = 'u32[]', space=smem, size = 0x4, offset = 0x4, fixed_abs, tag = 'smem constant byte address 0x4 - core index']
  #allocation1 [shape = 'u32[144,128]{1,0:T(1,128)}', space=vmem, size = 0x12000, scoped, tag = 'internal scratch']
  %s0 = inlined_call_operand.vmem [shape: bf16[8,896], index: 0, kind: input, shape index: {}]
  %s1 = inlined_call_operand.hbm [shape: bf16[896,256], index: 1, kind: input, shape index: {}]
  %s2 = inlined_call_operand.vmem [shape: f32[1,256], index: 2, kind: input, shape index: {}]
  %s3 = inlined_call_operand.hbm [shape: bf16[256,256], index: 3, kind: input, shape index: {}]
  %s4 = inlined_call_operand.vmem [shape: f32[1,256], index: 4, kind: input, shape index: {}]
  %s5 = inlined_call_operand.hbm [shape: bf16[256,256], index: 5, kind: input, shape index: {}]
  %s6 = inlined_call_operand.vmem [shape: f32[1,256], index: 6, kind: input, shape index: {}]
  %s7 = inlined_call_operand.vmem [shape: bf16[256,10], index: 7, kind: input, shape index: {}]
  %s8 = inlined_call_operand.vmem [shape: f32[1,10], index: 8, kind: input, shape index: {}]
  %s9 = inlined_call_operand.hbm [shape: f32[8,10], index: 9, kind: output, shape index: {}]
  %s10 = sld [smem:[#allocation0]]
  $region58: #{tpu_custom_call.1} parent=0
    _
  %s12 = ssub.s32 1, %s10
  %s13 = scalar_select 0, %s12, %s10
  $region1: #{tpu_custom_call.1} parent=0
    #allocation2 [shape = 'u8[458752]{0}', space=vmem, size = 0x70000, scoped, tag = 'input window, operand 1, single buffered']
    #allocation3 [shape = 's32[1]{0}', space=sflag, size = 0x4, scoped, tag = 'scoped memory for tpu_custom_call.1']
    #allocation4 [shape = 's32[1]{0}', space=sflag, size = 0x4, scoped, tag = 'scoped memory for tpu_custom_call.1']
    #allocation5 [shape = 'u8[131072]{0}', space=vmem, size = 0x20000, scoped, tag = 'input window, operand 3, single buffered']
    #allocation6 [shape = 's32[1]{0}', space=sflag, size = 0x4, scoped, tag = 'scoped memory for tpu_custom_call.1']
    #allocation7 [shape = 'u8[131072]{0}', space=vmem, size = 0x20000, scoped, tag = 'input window, operand 5, single buffered']
    #allocation8 [shape = 'u8[4096]{0}', space=vmem, size = 0x1000, scoped, tag = 'output window, operand 0, single buffered']
    %14 = vsyncpa [#allocation3], 0
    %15 = vsyncpa [#allocation6], 0
    %16 = vsyncpa [#allocation4], 0
    // Predicated region
    $region2: #{tpu_custom_call.1} parent=1 // pred_check
      _
    $region3: #{tpu_custom_call.1} parent=1 // pred_check_branch
      %18 = sbr.rel (0) target = $region5
    $region4: #{tpu_custom_call.1} parent=1 // pred_region
      _
    $region5: #{tpu_custom_call.1} parent=1 // pred_fallthru
      _
    // Predicated region
    $region6: #{tpu_custom_call.1} parent=1 // pred_check
      _
    $region7: #{tpu_custom_call.1} parent=1 // pred_check_branch
      %20 = sbr.rel (0) target = $region9
    $region8: #{tpu_custom_call.1} parent=1 // pred_region
      %s22 = ssub.s32 14336, 14336
      %23 = vsyncadd [#allocation3], %s22
      %s24 = sshll.u32 [#allocation2], 4
      %s25 = int_to_ptr.vmem [resolvable:$true] %s24
      %30 = dma.hbm_to_vmem [thread:$0]  %s1, 14336, %s25, [#allocation3], 128, 128, 8
    $region9: #{tpu_custom_call.1} parent=1 // pred_fallthru
      _
    // Predicated region
    $region10: #{tpu_custom_call.1} parent=1 // pred_check
      _
    $region11: #{tpu_custom_call.1} parent=1 // pred_check_branch
      %32 = sbr.rel (0) target = $region13
    $region12: #{tpu_custom_call.1} parent=1 // pred_region
      _
    $region13: #{tpu_custom_call.1} parent=1 // pred_fallthru
      _
    // Predicated region
    $region14: #{tpu_custom_call.1} parent=1 // pred_check
      _
    $region15: #{tpu_custom_call.1} parent=1 // pred_check_branch
      %34 = sbr.rel (0) target = $region17
    $region16: #{tpu_custom_call.1} parent=1 // pred_region
      %s36 = ssub.s32 4096, 4096
      %37 = vsyncadd [#allocation6], %s36
      %s38 = sshll.u32 [#allocation5], 4
      %s39 = int_to_ptr.vmem [resolvable:$true] %s38
      %44 = dma.hbm_to_vmem [thread:$0]  %s3, 4096, %s39, [#allocation6], 128, 128, 8
    $region17: #{tpu_custom_call.1} parent=1 // pred_fallthru
      _
    // Predicated region
    $region18: #{tpu_custom_call.1} parent=1 // pred_check
      _
    $region19: #{tpu_custom_call.1} parent=1 // pred_check_branch
      %46 = sbr.rel (0) target = $region21
    $region20: #{tpu_custom_call.1} parent=1 // pred_region
      _
    $region21: #{tpu_custom_call.1} parent=1 // pred_fallthru
      _
    // Predicated region
    $region22: #{tpu_custom_call.1} parent=1 // pred_check
      _
    $region23: #{tpu_custom_call.1} parent=1 // pred_check_branch
      %48 = sbr.rel (0) target = $region25
    $region24: #{tpu_custom_call.1} parent=1 // pred_region
      %s50 = ssub.s32 4096, 4096
      %51 = vsyncadd [#allocation6], %s50
      %s52 = sshll.u32 [#allocation7], 4
      %s53 = int_to_ptr.vmem [resolvable:$true] %s52
      %58 = dma.hbm_to_vmem [thread:$0]  %s5, 4096, %s53, [#allocation6], 128, 128, 8
    $region25: #{tpu_custom_call.1} parent=1 // pred_fallthru
      _
    // Predicated region
    $region26: #{tpu_custom_call.1} parent=1 // pred_check
      _
    $region27: #{tpu_custom_call.1} parent=1 // pred_check_branch
      %60 = sbr.rel (0) target = $region29
    $region28: #{tpu_custom_call.1} parent=1 // pred_region
      _
    $region29: #{tpu_custom_call.1} parent=1 // pred_fallthru
      _
    // Predicated region
    $region30: #{tpu_custom_call.1} parent=1 // pred_check
      _
    $region31: #{tpu_custom_call.1} parent=1 // pred_check_branch
      %62 = sbr.rel (0) target = $region33
    $region32: #{tpu_custom_call.1} parent=1 // pred_region
      _
    $region33: #{tpu_custom_call.1} parent=1 // pred_fallthru
      _
    // Predicated region
    $region34: #{tpu_custom_call.1} parent=1 // pred_check
      _
    $region35: #{tpu_custom_call.1} parent=1 // pred_check_branch
      %64 = sbr.rel (0) target = $region37
    $region36: #{tpu_custom_call.1} parent=1 // pred_region
      _
    $region37: #{tpu_custom_call.1} parent=1 // pred_fallthru
      _
    // Predicated region
    $region38: #{tpu_custom_call.1} parent=1 // pred_check
      _
    $region39: #{tpu_custom_call.1} parent=1 // pred_check_branch
      %66 = sbr.rel (0) target = $region41
    $region40: #{tpu_custom_call.1} parent=1 // pred_region
      %67 = dma.done [#allocation3], 14336
    $region41: #{tpu_custom_call.1} parent=1 // pred_fallthru
      _
    // Predicated region
    $region42: #{tpu_custom_call.1} parent=1 // pred_check
      _
    $region43: #{tpu_custom_call.1} parent=1 // pred_check_branch
      %69 = sbr.rel (0) target = $region45
    $region44: #{tpu_custom_call.1} parent=1 // pred_region
      %70 = dma.done [#allocation6], 4096
    $region45: #{tpu_custom_call.1} parent=1 // pred_fallthru
      _
    // Predicated region
    $region46: #{tpu_custom_call.1} parent=1 // pred_check
      _
    $region47: #{tpu_custom_call.1} parent=1 // pred_check_branch
      %72 = sbr.rel (0) target = $region49
    $region48: #{tpu_custom_call.1} parent=1 // pred_region
      %73 = dma.done [#allocation6], 4096
    $region49: #{tpu_custom_call.1} parent=1 // pred_fallthru
      _
    %v75 = vld [vmem:[%s0] sm:$0xff]
    %v76 = vld [vmem:[%s0 + $0x8] sm:$0xff]
    %v77 = vld [vmem:[%s0 + $0x10] sm:$0xff]
    %v78 = vld [vmem:[%s0 + $0x18] sm:$0xf]
    %v79 = vld [vmem:[#allocation2] sm:$0xff]
    %v80 = vld [vmem:[#allocation2 + $0x8] sm:$0xff]
    %v81 = vld [vmem:[#allocation2 + $0x10] sm:$0xff]
    %v82 = vld [vmem:[#allocation2 + $0x18] sm:$0xff]
    %v83 = vld [vmem:[#allocation2 + $0x20] sm:$0xff]
    %v84 = vld [vmem:[#allocation2 + $0x28] sm:$0xff]
    %v85 = vld [vmem:[#allocation2 + $0x30] sm:$0xff]
    %v86 = vld [vmem:[#allocation2 + $0x38] sm:$0xff]
    %v87 = vld [vmem:[#allocation2 + $0x40] sm:$0xff]
    %v88 = vld [vmem:[#allocation2 + $0x48] sm:$0xff]
    %v89 = vld [vmem:[#allocation2 + $0x50] sm:$0xff]
    %v90 = vld [vmem:[#allocation2 + $0x58] sm:$0xff]
    %v91 = vld [vmem:[#allocation2 + $0x60] sm:$0xff]
    %v92 = vld [vmem:[#allocation2 + $0x68] sm:$0xff]
    %v93 = vld [vmem:[#allocation2 + $0x70] sm:$0xff]
    %v94 = vld [vmem:[#allocation2 + $0x78] sm:$0xff]
    %v95 = vld [vmem:[#allocation2 + $0x80] sm:$0xff]
    %v96 = vld [vmem:[#allocation2 + $0x88] sm:$0xff]
    %v97 = vld [vmem:[#allocation2 + $0x90] sm:$0xff]
    %v98 = vld [vmem:[#allocation2 + $0x98] sm:$0xff]
    %v99 = vld [vmem:[#allocation2 + $0xa0] sm:$0xff]
    %v100 = vld [vmem:[#allocation2 + $0xa8] sm:$0xff]
    %v101 = vld [vmem:[#allocation2 + $0xb0] sm:$0xff]
    %v102 = vld [vmem:[#allocation2 + $0xb8] sm:$0xff]
    %v103 = vld [vmem:[#allocation2 + $0xc0] sm:$0xff]
    %v104 = vld [vmem:[#allocation2 + $0xc8] sm:$0xff]
    %v105 = vld [vmem:[#allocation2 + $0xd0] sm:$0xff]
    %v106 = vld [vmem:[#allocation2 + $0xd8] sm:$0xff]
    %v107 = vld [vmem:[#allocation2 + $0xe0] sm:$0xff]
    %v108 = vld [vmem:[#allocation2 + $0xe8] sm:$0xff]
    %v109 = vld [vmem:[#allocation2 + $0xf0] sm:$0xff]
    %v110 = vld [vmem:[#allocation2 + $0xf8] sm:$0xff]
    %v111 = vld [vmem:[#allocation2 + $0x100] sm:$0xff]
    %v112 = vld [vmem:[#allocation2 + $0x108] sm:$0xff]
    %v113 = vld [vmem:[#allocation2 + $0x110] sm:$0xff]
    %v114 = vld [vmem:[#allocation2 + $0x118] sm:$0xff]
    %v115 = vld [vmem:[#allocation2 + $0x120] sm:$0xff]
    %v116 = vld [vmem:[#allocation2 + $0x128] sm:$0xff]
    %v117 = vld [vmem:[#allocation2 + $0x130] sm:$0xff]
    %v118 = vld [vmem:[#allocation2 + $0x138] sm:$0xff]
    %v119 = vld [vmem:[#allocation2 + $0x140] sm:$0xff]
    %v120 = vld [vmem:[#allocation2 + $0x148] sm:$0xff]
    %v121 = vld [vmem:[#allocation2 + $0x150] sm:$0xff]
    %v122 = vld [vmem:[#allocation2 + $0x158] sm:$0xff]
    %v123 = vld [vmem:[#allocation2 + $0x160] sm:$0xff]
    %v124 = vld [vmem:[#allocation2 + $0x168] sm:$0xff]
    %v125 = vld [vmem:[#allocation2 + $0x170] sm:$0xff]
    %v126 = vld [vmem:[#allocation2 + $0x178] sm:$0xff]
    %v127 = vld [vmem:[#allocation2 + $0x180] sm:$0xff]
    %v128 = vld [vmem:[#allocation2 + $0x188] sm:$0xff]
    %v129 = vld [vmem:[#allocation2 + $0x190] sm:$0xff]
    %v130 = vld [vmem:[#allocation2 + $0x198] sm:$0xff]
    %v131 = vld [vmem:[#allocation2 + $0x1a0] sm:$0xff]
    %v132 = vld [vmem:[#allocation2 + $0x1a8] sm:$0xff]
    %v133 = vld [vmem:[#allocation2 + $0x1b0] sm:$0xff]
    %v134 = vld [vmem:[#allocation2 + $0x1b8] sm:$0xff]
    %v135 = vld [vmem:[#allocation2 + $0x1c0] sm:$0xff]
    %v136 = vld [vmem:[#allocation2 + $0x1c8] sm:$0xff]
    %v137 = vld [vmem:[#allocation2 + $0x1d0] sm:$0xff]
    %v138 = vld [vmem:[#allocation2 + $0x1d8] sm:$0xff]
    %v139 = vld [vmem:[#allocation2 + $0x1e0] sm:$0xff]
    %v140 = vld [vmem:[#allocation2 + $0x1e8] sm:$0xff]
    %v141 = vld [vmem:[#allocation2 + $0x1f0] sm:$0xff]
    %v142 = vld [vmem:[#allocation2 + $0x1f8] sm:$0xff]
    %v143 = vld [vmem:[#allocation2 + $0x200] sm:$0xff]
    %v144 = vld [vmem:[#allocation2 + $0x208] sm:$0xff]
    %v145 = vld [vmem:[#allocation2 + $0x210] sm:$0xff]
    %v146 = vld [vmem:[#allocation2 + $0x218] sm:$0xff]
    %v147 = vld [vmem:[#allocation2 + $0x220] sm:$0xff]
    %v148 = vld [vmem:[#allocation2 + $0x228] sm:$0xff]
    %v149 = vld [vmem:[#allocation2 + $0x230] sm:$0xff]
    %v150 = vld [vmem:[#allocation2 + $0x238] sm:$0xff]
    %v151 = vld [vmem:[#allocation2 + $0x240] sm:$0xff]
    %v152 = vld [vmem:[#allocation2 + $0x248] sm:$0xff]
    %v153 = vld [vmem:[#allocation2 + $0x250] sm:$0xff]
    %v154 = vld [vmem:[#allocation2 + $0x258] sm:$0xff]
    %v155 = vld [vmem:[#allocation2 + $0x260] sm:$0xff]
    %v156 = vld [vmem:[#allocation2 + $0x268] sm:$0xff]
    %v157 = vld [vmem:[#allocation2 + $0x270] sm:$0xff]
    %v158 = vld [vmem:[#allocation2 + $0x278] sm:$0xff]
    %v159 = vld [vmem:[#allocation2 + $0x280] sm:$0xff]
    %v160 = vld [vmem:[#allocation2 + $0x288] sm:$0xff]
    %v161 = vld [vmem:[#allocation2 + $0x290] sm:$0xff]
    %v162 = vld [vmem:[#allocation2 + $0x298] sm:$0xff]
    %v163 = vld [vmem:[#allocation2 + $0x2a0] sm:$0xff]
    %v164 = vld [vmem:[#allocation2 + $0x2a8] sm:$0xff]
    %v165 = vld [vmem:[#allocation2 + $0x2b0] sm:$0xff]
    %v166 = vld [vmem:[#allocation2 + $0x2b8] sm:$0xff]
    %v167 = vld [vmem:[#allocation2 + $0x2c0] sm:$0xff]
    %v168 = vld [vmem:[#allocation2 + $0x2c8] sm:$0xff]
    %v169 = vld [vmem:[#allocation2 + $0x2d0] sm:$0xff]
    %v170 = vld [vmem:[#allocation2 + $0x2d8] sm:$0xff]
    %v171 = vld [vmem:[#allocation2 + $0x2e0] sm:$0xff]
    %v172 = vld [vmem:[#allocation2 + $0x2e8] sm:$0xff]
    %v173 = vld [vmem:[#allocation2 + $0x2f0] sm:$0xff]
    %v174 = vld [vmem:[#allocation2 + $0x2f8] sm:$0xff]
    %v175 = vld [vmem:[#allocation2 + $0x300] sm:$0xff]
    %v176 = vld [vmem:[#allocation2 + $0x308] sm:$0xff]
    %v177 = vld [vmem:[#allocation2 + $0x310] sm:$0xff]
    %v178 = vld [vmem:[#allocation2 + $0x318] sm:$0xff]
    %v179 = vld [vmem:[#allocation2 + $0x320] sm:$0xff]
    %v180 = vld [vmem:[#allocation2 + $0x328] sm:$0xff]
    %v181 = vld [vmem:[#allocation2 + $0x330] sm:$0xff]
    %v182 = vld [vmem:[#allocation2 + $0x338] sm:$0xff]
    %v183 = vld [vmem:[#allocation2 + $0x340] sm:$0xff]
    %v184 = vld [vmem:[#allocation2 + $0x348] sm:$0xff]
    %v185 = vld [vmem:[#allocation2 + $0x350] sm:$0xff]
    %v186 = vld [vmem:[#allocation2 + $0x358] sm:$0xff]
    %v187 = vld [vmem:[#allocation2 + $0x360] sm:$0xff]
    %v188 = vld [vmem:[#allocation2 + $0x368] sm:$0xff]
    %v189 = vld [vmem:[#allocation2 + $0x370] sm:$0xff]
    %v190 = vld [vmem:[#allocation2 + $0x378] sm:$0xff]
    %v191 = vld [vmem:[%s2] sm:$0x3]
    %v193 = vlaneseq
    %v194 = vshrl.u32 %v193, 7
    %v195 = vsub.s32 0, %v194
    %v196 = vrot.slane %v191, %v195
    %v197 = vlaneseq
    %v198 = vshrl.u32 %v197, 7
    %v199 = vsub.s32 1, %v198
    %v200 = vrot.slane %v191, %v199
    %v207 = vunpack.c.l.b16 %v75
    %v208 = vunpack.c.h.b16 %v75
    %v209 = vunpack.c.l.b16 %v76
    %v210 = vunpack.c.h.b16 %v76
    %v211 = vunpack.c.l.b16 %v77
    %v212 = vunpack.c.h.b16 %v77
    %v213 = vunpack.c.l.b16 %v78
    %v214 = vpack.c.b16 %v207, %v207
    %v215 = vpack.c.b16 %v208, %v208
    %v216 = vpack.c.b16 %v209, %v209
    %v217 = vpack.c.b16 %v210, %v210
    %v218 = vpack.c.b16 %v211, %v211
    %v219 = vpack.c.b16 %v212, %v212
    %v220 = vpack.c.b16 %v213, %v213
    %v340 = vunpack.c.l.b16 %v79
    %v341 = vunpack.c.h.b16 %v79
    %v342 = vunpack.c.l.b16 %v80
    %v343 = vunpack.c.h.b16 %v80
    %v344 = vunpack.c.l.b16 %v81
    %v345 = vunpack.c.h.b16 %v81
    %v346 = vunpack.c.l.b16 %v82
    %v347 = vunpack.c.h.b16 %v82
    %v348 = vunpack.c.l.b16 %v83
    %v349 = vunpack.c.h.b16 %v83
    %v350 = vunpack.c.l.b16 %v84
    %v351 = vunpack.c.h.b16 %v84
    %v352 = vunpack.c.l.b16 %v85
    %v353 = vunpack.c.h.b16 %v85
    %v354 = vunpack.c.l.b16 %v86
    %v355 = vunpack.c.h.b16 %v86
    %v356 = vunpack.c.l.b16 %v87
    %v357 = vunpack.c.h.b16 %v87
    %v358 = vunpack.c.l.b16 %v88
    %v359 = vunpack.c.h.b16 %v88
    %v360 = vunpack.c.l.b16 %v89
    %v361 = vunpack.c.h.b16 %v89
    %v362 = vunpack.c.l.b16 %v90
    %v363 = vunpack.c.h.b16 %v90
    %v364 = vunpack.c.l.b16 %v91
    %v365 = vunpack.c.h.b16 %v91
    %v366 = vunpack.c.l.b16 %v92
    %v367 = vunpack.c.h.b16 %v92
    %v368 = vunpack.c.l.b16 %v93
    %v369 = vunpack.c.h.b16 %v93
    %v370 = vunpack.c.l.b16 %v94
    %v371 = vunpack.c.h.b16 %v94
    %v372 = vunpack.c.l.b16 %v95
    %v373 = vunpack.c.h.b16 %v95
    %v374 = vunpack.c.l.b16 %v96
    %v375 = vunpack.c.h.b16 %v96
    %v376 = vunpack.c.l.b16 %v97
    %v377 = vunpack.c.h.b16 %v97
    %v378 = vunpack.c.l.b16 %v98
    %v379 = vunpack.c.h.b16 %v98
    %v380 = vunpack.c.l.b16 %v99
    %v381 = vunpack.c.h.b16 %v99
    %v382 = vunpack.c.l.b16 %v100
    %v383 = vunpack.c.h.b16 %v100
    %v384 = vunpack.c.l.b16 %v101
    %v385 = vunpack.c.h.b16 %v101
    %v386 = vunpack.c.l.b16 %v102
    %v387 = vunpack.c.h.b16 %v102
    %v388 = vunpack.c.l.b16 %v103
    %v389 = vunpack.c.h.b16 %v103
    %v390 = vunpack.c.l.b16 %v104
    %v391 = vunpack.c.h.b16 %v104
    %v392 = vunpack.c.l.b16 %v105
    %v393 = vunpack.c.h.b16 %v105
    %v394 = vunpack.c.l.b16 %v106
    %v395 = vunpack.c.h.b16 %v106
    %v396 = vunpack.c.l.b16 %v107
    %v397 = vunpack.c.h.b16 %v107
    %v398 = vunpack.c.l.b16 %v108
    %v399 = vunpack.c.h.b16 %v108
    %v400 = vunpack.c.l.b16 %v109
    %v401 = vunpack.c.h.b16 %v109
    %v402 = vunpack.c.l.b16 %v110
    %v403 = vunpack.c.h.b16 %v110
    %v404 = vunpack.c.l.b16 %v111
    %v405 = vunpack.c.h.b16 %v111
    %v406 = vunpack.c.l.b16 %v112
    %v407 = vunpack.c.h.b16 %v112
    %v408 = vunpack.c.l.b16 %v113
    %v409 = vunpack.c.h.b16 %v113
    %v410 = vunpack.c.l.b16 %v114
    %v411 = vunpack.c.h.b16 %v114
    %v412 = vunpack.c.l.b16 %v115
    %v413 = vunpack.c.h.b16 %v115
    %v414 = vunpack.c.l.b16 %v116
    %v415 = vunpack.c.h.b16 %v116
    %v416 = vunpack.c.l.b16 %v117
    %v417 = vunpack.c.h.b16 %v117
    %v418 = vunpack.c.l.b16 %v118
    %v419 = vunpack.c.h.b16 %v118
    %v420 = vunpack.c.l.b16 %v119
    %v421 = vunpack.c.h.b16 %v119
    %v422 = vunpack.c.l.b16 %v120
    %v423 = vunpack.c.h.b16 %v120
    %v424 = vunpack.c.l.b16 %v121
    %v425 = vunpack.c.h.b16 %v121
    %v426 = vunpack.c.l.b16 %v122
    %v427 = vunpack.c.h.b16 %v122
    %v428 = vunpack.c.l.b16 %v123
    %v429 = vunpack.c.h.b16 %v123
    %v430 = vunpack.c.l.b16 %v124
    %v431 = vunpack.c.h.b16 %v124
    %v432 = vunpack.c.l.b16 %v125
    %v433 = vunpack.c.h.b16 %v125
    %v434 = vunpack.c.l.b16 %v126
    %v435 = vunpack.c.h.b16 %v126
    %v436 = vunpack.c.l.b16 %v127
    %v437 = vunpack.c.h.b16 %v127
    %v438 = vunpack.c.l.b16 %v128
    %v439 = vunpack.c.h.b16 %v128
    %v440 = vunpack.c.l.b16 %v129
    %v441 = vunpack.c.h.b16 %v129
    %v442 = vunpack.c.l.b16 %v130
    %v443 = vunpack.c.h.b16 %v130
    %v444 = vunpack.c.l.b16 %v131
    %v445 = vunpack.c.h.b16 %v131
    %v446 = vunpack.c.l.b16 %v132
    %v447 = vunpack.c.h.b16 %v132
    %v448 = vunpack.c.l.b16 %v133
    %v449 = vunpack.c.h.b16 %v133
    %v450 = vunpack.c.l.b16 %v134
    %v451 = vunpack.c.h.b16 %v134
    %v452 = vunpack.c.l.b16 %v135
    %v453 = vunpack.c.h.b16 %v135
    %v454 = vunpack.c.l.b16 %v136
    %v455 = vunpack.c.h.b16 %v136
    %v456 = vunpack.c.l.b16 %v137
    %v457 = vunpack.c.h.b16 %v137
    %v458 = vunpack.c.l.b16 %v138
    %v459 = vunpack.c.h.b16 %v138
    %v460 = vunpack.c.l.b16 %v139
    %v461 = vunpack.c.h.b16 %v139
    %v462 = vunpack.c.l.b16 %v140
    %v463 = vunpack.c.h.b16 %v140
    %v464 = vunpack.c.l.b16 %v141
    %v465 = vunpack.c.h.b16 %v141
    %v466 = vunpack.c.l.b16 %v142
    %v467 = vunpack.c.h.b16 %v142
    %v468 = vunpack.c.l.b16 %v143
    %v469 = vunpack.c.h.b16 %v143
    %v470 = vunpack.c.l.b16 %v144
    %v471 = vunpack.c.h.b16 %v144
    %v472 = vunpack.c.l.b16 %v145
    %v473 = vunpack.c.h.b16 %v145
    %v474 = vunpack.c.l.b16 %v146
    %v475 = vunpack.c.h.b16 %v146
    %v476 = vunpack.c.l.b16 %v147
    %v477 = vunpack.c.h.b16 %v147
    %v478 = vunpack.c.l.b16 %v148
    %v479 = vunpack.c.h.b16 %v148
    %v480 = vunpack.c.l.b16 %v149
    %v481 = vunpack.c.h.b16 %v149
    %v482 = vunpack.c.l.b16 %v150
    %v483 = vunpack.c.h.b16 %v150
    %v484 = vunpack.c.l.b16 %v151
    %v485 = vunpack.c.h.b16 %v151
    %v486 = vunpack.c.l.b16 %v152
    %v487 = vunpack.c.h.b16 %v152
    %v488 = vunpack.c.l.b16 %v153
    %v489 = vunpack.c.h.b16 %v153
    %v490 = vunpack.c.l.b16 %v154
    %v491 = vunpack.c.h.b16 %v154
    %v492 = vunpack.c.l.b16 %v155
    %v493 = vunpack.c.h.b16 %v155
    %v494 = vunpack.c.l.b16 %v156
    %v495 = vunpack.c.h.b16 %v156
    %v496 = vunpack.c.l.b16 %v157
    %v497 = vunpack.c.h.b16 %v157
    %v498 = vunpack.c.l.b16 %v158
    %v499 = vunpack.c.h.b16 %v158
    %v500 = vunpack.c.l.b16 %v159
    %v501 = vunpack.c.h.b16 %v159
    %v502 = vunpack.c.l.b16 %v160
    %v503 = vunpack.c.h.b16 %v160
    %v504 = vunpack.c.l.b16 %v161
    %v505 = vunpack.c.h.b16 %v161
    %v506 = vunpack.c.l.b16 %v162
    %v507 = vunpack.c.h.b16 %v162
    %v508 = vunpack.c.l.b16 %v163
    %v509 = vunpack.c.h.b16 %v163
    %v510 = vunpack.c.l.b16 %v164
    %v511 = vunpack.c.h.b16 %v164
    %v512 = vunpack.c.l.b16 %v165
    %v513 = vunpack.c.h.b16 %v165
    %v514 = vunpack.c.l.b16 %v166
    %v515 = vunpack.c.h.b16 %v166
    %v516 = vunpack.c.l.b16 %v167
    %v517 = vunpack.c.h.b16 %v167
    %v518 = vunpack.c.l.b16 %v168
    %v519 = vunpack.c.h.b16 %v168
    %v520 = vunpack.c.l.b16 %v169
    %v521 = vunpack.c.h.b16 %v169
    %v522 = vunpack.c.l.b16 %v170
    %v523 = vunpack.c.h.b16 %v170
    %v524 = vunpack.c.l.b16 %v171
    %v525 = vunpack.c.h.b16 %v171
    %v526 = vunpack.c.l.b16 %v172
    %v527 = vunpack.c.h.b16 %v172
    %v528 = vunpack.c.l.b16 %v173
    %v529 = vunpack.c.h.b16 %v173
    %v530 = vunpack.c.l.b16 %v174
    %v531 = vunpack.c.h.b16 %v174
    %v532 = vunpack.c.l.b16 %v175
    %v533 = vunpack.c.h.b16 %v175
    %v534 = vunpack.c.l.b16 %v176
    %v535 = vunpack.c.h.b16 %v176
    %v536 = vunpack.c.l.b16 %v177
    %v537 = vunpack.c.h.b16 %v177
    %v538 = vunpack.c.l.b16 %v178
    %v539 = vunpack.c.h.b16 %v178
    %v540 = vunpack.c.l.b16 %v179
    %v541 = vunpack.c.h.b16 %v179
    %v542 = vunpack.c.l.b16 %v180
    %v543 = vunpack.c.h.b16 %v180
    %v544 = vunpack.c.l.b16 %v181
    %v545 = vunpack.c.h.b16 %v181
    %v546 = vunpack.c.l.b16 %v182
    %v547 = vunpack.c.h.b16 %v182
    %v548 = vunpack.c.l.b16 %v183
    %v549 = vunpack.c.h.b16 %v183
    %v550 = vunpack.c.l.b16 %v184
    %v551 = vunpack.c.h.b16 %v184
    %v552 = vunpack.c.l.b16 %v185
    %v553 = vunpack.c.h.b16 %v185
    %v554 = vunpack.c.l.b16 %v186
    %v555 = vunpack.c.h.b16 %v186
    %v556 = vunpack.c.l.b16 %v187
    %v557 = vunpack.c.h.b16 %v187
    %v558 = vunpack.c.l.b16 %v188
    %v559 = vunpack.c.h.b16 %v188
    %v560 = vunpack.c.l.b16 %v189
    %v561 = vunpack.c.h.b16 %v189
    %v562 = vunpack.c.l.b16 %v190
    %v563 = vunpack.c.h.b16 %v190
    %v564 = vpack.c.b16 %v342, %v340
    %v565 = vpack.c.b16 %v343, %v341
    %v566 = vpack.c.b16 %v346, %v344
    %v567 = vpack.c.b16 %v347, %v345
    %v568 = vpack.c.b16 %v350, %v348
    %v569 = vpack.c.b16 %v351, %v349
    %v570 = vpack.c.b16 %v354, %v352
    %v571 = vpack.c.b16 %v355, %v353
    %v572 = vpack.c.b16 %v358, %v356
    %v573 = vpack.c.b16 %v359, %v357
    %v574 = vpack.c.b16 %v362, %v360
    %v575 = vpack.c.b16 %v363, %v361
    %v576 = vpack.c.b16 %v366, %v364
    %v577 = vpack.c.b16 %v367, %v365
    %v578 = vpack.c.b16 %v370, %v368
    %v579 = vpack.c.b16 %v371, %v369
    %v580 = vpack.c.b16 %v374, %v372
    %v581 = vpack.c.b16 %v375, %v373
    %v582 = vpack.c.b16 %v378, %v376
    %v583 = vpack.c.b16 %v379, %v377
    %v584 = vpack.c.b16 %v382, %v380
    %v585 = vpack.c.b16 %v383, %v381
    %v586 = vpack.c.b16 %v386, %v384
    %v587 = vpack.c.b16 %v387, %v385
    %v588 = vpack.c.b16 %v390, %v388
    %v589 = vpack.c.b16 %v391, %v389
    %v590 = vpack.c.b16 %v394, %v392
    %v591 = vpack.c.b16 %v395, %v393
    %v592 = vpack.c.b16 %v398, %v396
    %v593 = vpack.c.b16 %v399, %v397
    %v594 = vpack.c.b16 %v402, %v400
    %v595 = vpack.c.b16 %v403, %v401
    %v596 = vpack.c.b16 %v406, %v404
    %v597 = vpack.c.b16 %v407, %v405
    %v598 = vpack.c.b16 %v410, %v408
    %v599 = vpack.c.b16 %v411, %v409
    %v600 = vpack.c.b16 %v414, %v412
    %v601 = vpack.c.b16 %v415, %v413
    %v602 = vpack.c.b16 %v418, %v416
    %v603 = vpack.c.b16 %v419, %v417
    %v604 = vpack.c.b16 %v422, %v420
    %v605 = vpack.c.b16 %v423, %v421
    %v606 = vpack.c.b16 %v426, %v424
    %v607 = vpack.c.b16 %v427, %v425
    %v608 = vpack.c.b16 %v430, %v428
    %v609 = vpack.c.b16 %v431, %v429
    %v610 = vpack.c.b16 %v434, %v432
    %v611 = vpack.c.b16 %v435, %v433
    %v612 = vpack.c.b16 %v438, %v436
    %v613 = vpack.c.b16 %v439, %v437
    %v614 = vpack.c.b16 %v442, %v440
    %v615 = vpack.c.b16 %v443, %v441
    %v616 = vpack.c.b16 %v446, %v444
    %v617 = vpack.c.b16 %v447, %v445
    %v618 = vpack.c.b16 %v450, %v448
    %v619 = vpack.c.b16 %v451, %v449
    %v620 = vpack.c.b16 %v454, %v452
    %v621 = vpack.c.b16 %v455, %v453
    %v622 = vpack.c.b16 %v458, %v456
    %v623 = vpack.c.b16 %v459, %v457
    %v624 = vpack.c.b16 %v462, %v460
    %v625 = vpack.c.b16 %v463, %v461
    %v626 = vpack.c.b16 %v466, %v464
    %v627 = vpack.c.b16 %v467, %v465
    %v628 = vpack.c.b16 %v470, %v468
    %v629 = vpack.c.b16 %v471, %v469
    %v630 = vpack.c.b16 %v474, %v472
    %v631 = vpack.c.b16 %v475, %v473
    %v632 = vpack.c.b16 %v478, %v476
    %v633 = vpack.c.b16 %v479, %v477
    %v634 = vpack.c.b16 %v482, %v480
    %v635 = vpack.c.b16 %v483, %v481
    %v636 = vpack.c.b16 %v486, %v484
    %v637 = vpack.c.b16 %v487, %v485
    %v638 = vpack.c.b16 %v490, %v488
    %v639 = vpack.c.b16 %v491, %v489
    %v640 = vpack.c.b16 %v494, %v492
    %v641 = vpack.c.b16 %v495, %v493
    %v642 = vpack.c.b16 %v498, %v496
    %v643 = vpack.c.b16 %v499, %v497
    %v644 = vpack.c.b16 %v502, %v500
    %v645 = vpack.c.b16 %v503, %v501
    %v646 = vpack.c.b16 %v506, %v504
    %v647 = vpack.c.b16 %v507, %v505
    %v648 = vpack.c.b16 %v510, %v508
    %v649 = vpack.c.b16 %v511, %v509
    %v650 = vpack.c.b16 %v514, %v512
    %v651 = vpack.c.b16 %v515, %v513
    %v652 = vpack.c.b16 %v518, %v516
    %v653 = vpack.c.b16 %v519, %v517
    %v654 = vpack.c.b16 %v522, %v520
    %v655 = vpack.c.b16 %v523, %v521
    %v656 = vpack.c.b16 %v526, %v524
    %v657 = vpack.c.b16 %v527, %v525
    %v658 = vpack.c.b16 %v530, %v528
    %v659 = vpack.c.b16 %v531, %v529
    %v660 = vpack.c.b16 %v534, %v532
    %v661 = vpack.c.b16 %v535, %v533
    %v662 = vpack.c.b16 %v538, %v536
    %v663 = vpack.c.b16 %v539, %v537
    %v664 = vpack.c.b16 %v542, %v540
    %v665 = vpack.c.b16 %v543, %v541
    %v666 = vpack.c.b16 %v546, %v544
    %v667 = vpack.c.b16 %v547, %v545
    %v668 = vpack.c.b16 %v550, %v548
    %v669 = vpack.c.b16 %v551, %v549
    %v670 = vpack.c.b16 %v554, %v552
    %v671 = vpack.c.b16 %v555, %v553
    %v672 = vpack.c.b16 %v558, %v556
    %v673 = vpack.c.b16 %v559, %v557
    %v674 = vpack.c.b16 %v562, %v560
    %v675 = vpack.c.b16 %v563, %v561
    %788 = vmatprep.subr.bf16.mxu0 %v579
    %789 = vmatpush1.bf16.msra.mxu0 %v578
    %790 = vmatprep.subr.bf16.mxu0 %v577
    %791 = vmatpush1.bf16.msra.mxu0 %v576
    %792 = vmatprep.subr.bf16.mxu0 %v575
    %793 = vmatpush1.bf16.msra.mxu0 %v574
    %794 = vmatprep.subr.bf16.mxu0 %v573
    %795 = vmatpush1.bf16.msra.mxu0 %v572
    %796 = vmatprep.subr.bf16.mxu0 %v571
    %797 = vmatpush1.bf16.msra.mxu0 %v570
    %798 = vmatprep.subr.bf16.mxu0 %v569
    %799 = vmatpush1.bf16.msra.mxu0 %v568
    %800 = vmatprep.subr.bf16.mxu0 %v567
    %801 = vmatpush1.bf16.msra.mxu0 %v566
    %802 = vmatprep.subr.bf16.mxu0 %v565
    %803 = vmatpush1.bf16.msra.mxu0 %v564
    %804 = vmatprep.subr.bf16.mxu0 %v595
    %805 = vmatpush2.bf16.msra.mxu0 %v594
    %806 = vmatprep.subr.bf16.mxu0 %v593
    %807 = vmatpush2.bf16.msra.mxu0 %v592
    %808 = vmatprep.subr.bf16.mxu0 %v591
    %809 = vmatpush2.bf16.msra.mxu0 %v590
    %810 = vmatprep.subr.bf16.mxu0 %v589
    %811 = vmatpush2.bf16.msra.mxu0 %v588
    %812 = vmatprep.subr.bf16.mxu0 %v587
    %813 = vmatpush2.bf16.msra.mxu0 %v586
    %814 = vmatprep.subr.bf16.mxu0 %v585
    %815 = vmatpush2.bf16.msra.mxu0 %v584
    %816 = vmatprep.subr.bf16.mxu0 %v583
    %817 = vmatpush2.bf16.msra.mxu0 %v582
    %818 = vmatprep.subr.bf16.mxu0 %v581
    %819 = vmatpush2.bf16.msra.mxu0 %v580
    %820 = vmatprep.mubr.bf16.mxu0 %v215
    %821 = vmatmul.mubr.bf16.gmra.mxu0 %v214
    %v822 = vpop.f32.mrf.mxu0
    %v823 = vadd.f32 %v196, %v822
    %v824 = vpop.f32.mrf.mxu0
    %v825 = vadd.f32 %v200, %v824
    %v826 = vpop.f32.mrf.mxu0
    %v827 = vpop.f32.mrf.mxu0
    %828 = vdwg.mxu0
    %829 = vmatprep.subr.bf16.mxu0 %v611
    %830 = vmatpush1.bf16.msra.mxu0 %v610
    %831 = vmatprep.subr.bf16.mxu0 %v609
    %832 = vmatpush1.bf16.msra.mxu0 %v608
    %833 = vmatprep.subr.bf16.mxu0 %v607
    %834 = vmatpush1.bf16.msra.mxu0 %v606
    %835 = vmatprep.subr.bf16.mxu0 %v605
    %836 = vmatpush1.bf16.msra.mxu0 %v604
    %837 = vmatprep.subr.bf16.mxu0 %v603
    %838 = vmatpush1.bf16.msra.mxu0 %v602
    %839 = vmatprep.subr.bf16.mxu0 %v601
    %840 = vmatpush1.bf16.msra.mxu0 %v600
    %841 = vmatprep.subr.bf16.mxu0 %v599
    %842 = vmatpush1.bf16.msra.mxu0 %v598
    %843 = vmatprep.subr.bf16.mxu0 %v597
    %844 = vmatpush1.bf16.msra.mxu0 %v596
    %845 = vmatprep.subr.bf16.mxu0 %v627
    %846 = vmatpush2.bf16.msra.mxu0 %v626
    %847 = vmatprep.subr.bf16.mxu0 %v625
    %848 = vmatpush2.bf16.msra.mxu0 %v624
    %849 = vmatprep.subr.bf16.mxu0 %v623
    %850 = vmatpush2.bf16.msra.mxu0 %v622
    %851 = vmatprep.subr.bf16.mxu0 %v621
    %852 = vmatpush2.bf16.msra.mxu0 %v620
    %853 = vmatprep.subr.bf16.mxu0 %v619
    %854 = vmatpush2.bf16.msra.mxu0 %v618
    %855 = vmatprep.subr.bf16.mxu0 %v617
    %856 = vmatpush2.bf16.msra.mxu0 %v616
    %857 = vmatprep.subr.bf16.mxu0 %v615
    %858 = vmatpush2.bf16.msra.mxu0 %v614
    %859 = vmatprep.subr.bf16.mxu0 %v613
    %860 = vmatpush2.bf16.msra.mxu0 %v612
    %861 = vmatprep.mubr.bf16.mxu0 %v217
    %862 = vmatmul.mubr.bf16.gmra.mxu0 %v216
    %v863 = vpop.f32.mrf.mxu0
    %v864 = vadd.f32 %v823, %v863
    %v865 = vpop.f32.mrf.mxu0
    %v866 = vadd.f32 %v825, %v865
    %v867 = vpop.f32.mrf.mxu0
    %v868 = vpop.f32.mrf.mxu0
    %869 = vdwg.mxu0
    %870 = vmatprep.subr.bf16.mxu0 %v643
    %871 = vmatpush1.bf16.msra.mxu0 %v642
    %872 = vmatprep.subr.bf16.mxu0 %v641
    %873 = vmatpush1.bf16.msra.mxu0 %v640
    %874 = vmatprep.subr.bf16.mxu0 %v639
    %875 = vmatpush1.bf16.msra.mxu0 %v638
    %876 = vmatprep.subr.bf16.mxu0 %v637
    %877 = vmatpush1.bf16.msra.mxu0 %v636
    %878 = vmatprep.subr.bf16.mxu0 %v635
    %879 = vmatpush1.bf16.msra.mxu0 %v634
    %880 = vmatprep.subr.bf16.mxu0 %v633
    %881 = vmatpush1.bf16.msra.mxu0 %v632
    %882 = vmatprep.subr.bf16.mxu0 %v631
    %883 = vmatpush1.bf16.msra.mxu0 %v630
    %884 = vmatprep.subr.bf16.mxu0 %v629
    %885 = vmatpush1.bf16.msra.mxu0 %v628
    %886 = vmatprep.subr.bf16.mxu0 %v659
    %887 = vmatpush2.bf16.msra.mxu0 %v658
    %888 = vmatprep.subr.bf16.mxu0 %v657
    %889 = vmatpush2.bf16.msra.mxu0 %v656
    %890 = vmatprep.subr.bf16.mxu0 %v655
    %891 = vmatpush2.bf16.msra.mxu0 %v654
    %892 = vmatprep.subr.bf16.mxu0 %v653
    %893 = vmatpush2.bf16.msra.mxu0 %v652
    %894 = vmatprep.subr.bf16.mxu0 %v651
    %895 = vmatpush2.bf16.msra.mxu0 %v650
    %896 = vmatprep.subr.bf16.mxu0 %v649
    %897 = vmatpush2.bf16.msra.mxu0 %v648
    %898 = vmatprep.subr.bf16.mxu0 %v647
    %899 = vmatpush2.bf16.msra.mxu0 %v646
    %900 = vmatprep.subr.bf16.mxu0 %v645
    %901 = vmatpush2.bf16.msra.mxu0 %v644
    %902 = vmatprep.mubr.bf16.mxu0 %v219
    %903 = vmatmul.mubr.bf16.gmra.mxu0 %v218
    %v904 = vpop.f32.mrf.mxu0
    %v905 = vadd.f32 %v864, %v904
    %v906 = vpop.f32.mrf.mxu0
    %v907 = vadd.f32 %v866, %v906
    %v908 = vpop.f32.mrf.mxu0
    %v909 = vpop.f32.mrf.mxu0
    %910 = vdwg.mxu0
    %911 = vmatprep.subr.bf16.mxu0 %v675
    %912 = vmatpush1.bf16.msra.mxu0 %v674
    %913 = vmatprep.subr.bf16.mxu0 %v673
    %914 = vmatpush1.bf16.msra.mxu0 %v672
    %915 = vmatprep.subr.bf16.mxu0 %v671
    %916 = vmatpush1.bf16.msra.mxu0 %v670
    %917 = vmatprep.subr.bf16.mxu0 %v669
    %918 = vmatpush1.bf16.msra.mxu0 %v668
    %919 = vmatprep.subr.bf16.mxu0 %v667
    %920 = vmatpush1.bf16.msra.mxu0 %v666
    %921 = vmatprep.subr.bf16.mxu0 %v665
    %922 = vmatpush1.bf16.msra.mxu0 %v664
    %923 = vmatprep.subr.bf16.mxu0 %v663
    %924 = vmatpush1.bf16.msra.mxu0 %v662
    %925 = vmatprep.subr.bf16.mxu0 %v661
    %926 = vmatpush1.bf16.msra.mxu0 %v660
    %927 = vmatprep.subr.bf16.mxu0 0
    %928 = vmatpush2.bf16.msra.mxu0 0
    %929 = vmatprep.subr.bf16.mxu0 0
    %930 = vmatpush2.bf16.msra.mxu0 0
    %931 = vmatprep.subr.bf16.mxu0 0
    %932 = vmatpush2.bf16.msra.mxu0 0
    %933 = vmatprep.subr.bf16.mxu0 0
    %934 = vmatpush2.bf16.msra.mxu0 0
    %935 = vmatprep.subr.bf16.mxu0 0
    %936 = vmatpush2.bf16.msra.mxu0 0
    %937 = vmatprep.subr.bf16.mxu0 0
    %938 = vmatpush2.bf16.msra.mxu0 0
    %939 = vmatprep.subr.bf16.mxu0 0
    %940 = vmatpush2.bf16.msra.mxu0 0
    %941 = vmatprep.subr.bf16.mxu0 0
    %942 = vmatpush2.bf16.msra.mxu0 0
    %943 = vmatprep.mubr.bf16.mxu0 0
    %944 = vmatmul.mubr.bf16.gmra.mxu0 %v220
    %v945 = vpop.f32.mrf.mxu0
    %v946 = vadd.f32 %v905, %v945
    %v947 = vpop.f32.mrf.mxu0
    %v948 = vadd.f32 %v907, %v947
    %v949 = vpop.f32.mrf.mxu0
    %v950 = vpop.f32.mrf.mxu0
    %951 = vdwg.mxu0
    %v952 = vmax.f32 %v946, 0.0
    %v953 = vmax.f32 %v948, 0.0
    %v954 = vpack.c.bf16 %v952, %v952
    %v955 = vpack.c.bf16 %v953, %v953
    %v956 = vld [vmem:[#allocation5] sm:$0xff]
    %v957 = vld [vmem:[#allocation5 + $0x8] sm:$0xff]
    %v958 = vld [vmem:[#allocation5 + $0x10] sm:$0xff]
    %v959 = vld [vmem:[#allocation5 + $0x18] sm:$0xff]
    %v960 = vld [vmem:[#allocation5 + $0x20] sm:$0xff]
    %v961 = vld [vmem:[#allocation5 + $0x28] sm:$0xff]
    %v962 = vld [vmem:[#allocation5 + $0x30] sm:$0xff]
    %v963 = vld [vmem:[#allocation5 + $0x38] sm:$0xff]
    %v964 = vld [vmem:[#allocation5 + $0x40] sm:$0xff]
    %v965 = vld [vmem:[#allocation5 + $0x48] sm:$0xff]
    %v966 = vld [vmem:[#allocation5 + $0x50] sm:$0xff]
    %v967 = vld [vmem:[#allocation5 + $0x58] sm:$0xff]
    %v968 = vld [vmem:[#allocation5 + $0x60] sm:$0xff]
    %v969 = vld [vmem:[#allocation5 + $0x68] sm:$0xff]
    %v970 = vld [vmem:[#allocation5 + $0x70] sm:$0xff]
    %v971 = vld [vmem:[#allocation5 + $0x78] sm:$0xff]
    %v972 = vld [vmem:[#allocation5 + $0x80] sm:$0xff]
    %v973 = vld [vmem:[#allocation5 + $0x88] sm:$0xff]
    %v974 = vld [vmem:[#allocation5 + $0x90] sm:$0xff]
    %v975 = vld [vmem:[#allocation5 + $0x98] sm:$0xff]
    %v976 = vld [vmem:[#allocation5 + $0xa0] sm:$0xff]
    %v977 = vld [vmem:[#allocation5 + $0xa8] sm:$0xff]
    %v978 = vld [vmem:[#allocation5 + $0xb0] sm:$0xff]
    %v979 = vld [vmem:[#allocation5 + $0xb8] sm:$0xff]
    %v980 = vld [vmem:[#allocation5 + $0xc0] sm:$0xff]
    %v981 = vld [vmem:[#allocation5 + $0xc8] sm:$0xff]
    %v982 = vld [vmem:[#allocation5 + $0xd0] sm:$0xff]
    %v983 = vld [vmem:[#allocation5 + $0xd8] sm:$0xff]
    %v984 = vld [vmem:[#allocation5 + $0xe0] sm:$0xff]
    %v985 = vld [vmem:[#allocation5 + $0xe8] sm:$0xff]
    %v986 = vld [vmem:[#allocation5 + $0xf0] sm:$0xff]
    %v987 = vld [vmem:[#allocation5 + $0xf8] sm:$0xff]
    %v988 = vld [vmem:[%s4] sm:$0x3]
    %v990 = vlaneseq
    %v991 = vshrl.u32 %v990, 7
    %v992 = vsub.s32 0, %v991
    %v993 = vrot.slane %v988, %v992
    %v994 = vlaneseq
    %v995 = vshrl.u32 %v994, 7
    %v996 = vsub.s32 1, %v995
    %v997 = vrot.slane %v988, %v996
    %v1032 = vunpack.c.l.b16 %v956
    %v1033 = vunpack.c.h.b16 %v956
    %v1034 = vunpack.c.l.b16 %v957
    %v1035 = vunpack.c.h.b16 %v957
    %v1036 = vunpack.c.l.b16 %v958
    %v1037 = vunpack.c.h.b16 %v958
    %v1038 = vunpack.c.l.b16 %v959
    %v1039 = vunpack.c.h.b16 %v959
    %v1040 = vunpack.c.l.b16 %v960
    %v1041 = vunpack.c.h.b16 %v960
    %v1042 = vunpack.c.l.b16 %v961
    %v1043 = vunpack.c.h.b16 %v961
    %v1044 = vunpack.c.l.b16 %v962
    %v1045 = vunpack.c.h.b16 %v962
    %v1046 = vunpack.c.l.b16 %v963
    %v1047 = vunpack.c.h.b16 %v963
    %v1048 = vunpack.c.l.b16 %v964
    %v1049 = vunpack.c.h.b16 %v964
    %v1050 = vunpack.c.l.b16 %v965
    %v1051 = vunpack.c.h.b16 %v965
    %v1052 = vunpack.c.l.b16 %v966
    %v1053 = vunpack.c.h.b16 %v966
    %v1054 = vunpack.c.l.b16 %v967
    %v1055 = vunpack.c.h.b16 %v967
    %v1056 = vunpack.c.l.b16 %v968
    %v1057 = vunpack.c.h.b16 %v968
    %v1058 = vunpack.c.l.b16 %v969
    %v1059 = vunpack.c.h.b16 %v969
    %v1060 = vunpack.c.l.b16 %v970
    %v1061 = vunpack.c.h.b16 %v970
    %v1062 = vunpack.c.l.b16 %v971
    %v1063 = vunpack.c.h.b16 %v971
    %v1064 = vunpack.c.l.b16 %v972
    %v1065 = vunpack.c.h.b16 %v972
    %v1066 = vunpack.c.l.b16 %v973
    %v1067 = vunpack.c.h.b16 %v973
    %v1068 = vunpack.c.l.b16 %v974
    %v1069 = vunpack.c.h.b16 %v974
    %v1070 = vunpack.c.l.b16 %v975
    %v1071 = vunpack.c.h.b16 %v975
    %v1072 = vunpack.c.l.b16 %v976
    %v1073 = vunpack.c.h.b16 %v976
    %v1074 = vunpack.c.l.b16 %v977
    %v1075 = vunpack.c.h.b16 %v977
    %v1076 = vunpack.c.l.b16 %v978
    %v1077 = vunpack.c.h.b16 %v978
    %v1078 = vunpack.c.l.b16 %v979
    %v1079 = vunpack.c.h.b16 %v979
    %v1080 = vunpack.c.l.b16 %v980
    %v1081 = vunpack.c.h.b16 %v980
    %v1082 = vunpack.c.l.b16 %v981
    %v1083 = vunpack.c.h.b16 %v981
    %v1084 = vunpack.c.l.b16 %v982
    %v1085 = vunpack.c.h.b16 %v982
    %v1086 = vunpack.c.l.b16 %v983
    %v1087 = vunpack.c.h.b16 %v983
    %v1088 = vunpack.c.l.b16 %v984
    %v1089 = vunpack.c.h.b16 %v984
    %v1090 = vunpack.c.l.b16 %v985
    %v1091 = vunpack.c.h.b16 %v985
    %v1092 = vunpack.c.l.b16 %v986
    %v1093 = vunpack.c.h.b16 %v986
    %v1094 = vunpack.c.l.b16 %v987
    %v1095 = vunpack.c.h.b16 %v987
    %v1096 = vpack.c.b16 %v1034, %v1032
    %v1097 = vpack.c.b16 %v1035, %v1033
    %v1098 = vpack.c.b16 %v1038, %v1036
    %v1099 = vpack.c.b16 %v1039, %v1037
    %v1100 = vpack.c.b16 %v1042, %v1040
    %v1101 = vpack.c.b16 %v1043, %v1041
    %v1102 = vpack.c.b16 %v1046, %v1044
    %v1103 = vpack.c.b16 %v1047, %v1045
    %v1104 = vpack.c.b16 %v1050, %v1048
    %v1105 = vpack.c.b16 %v1051, %v1049
    %v1106 = vpack.c.b16 %v1054, %v1052
    %v1107 = vpack.c.b16 %v1055, %v1053
    %v1108 = vpack.c.b16 %v1058, %v1056
    %v1109 = vpack.c.b16 %v1059, %v1057
    %v1110 = vpack.c.b16 %v1062, %v1060
    %v1111 = vpack.c.b16 %v1063, %v1061
    %v1112 = vpack.c.b16 %v1066, %v1064
    %v1113 = vpack.c.b16 %v1067, %v1065
    %v1114 = vpack.c.b16 %v1070, %v1068
    %v1115 = vpack.c.b16 %v1071, %v1069
    %v1116 = vpack.c.b16 %v1074, %v1072
    %v1117 = vpack.c.b16 %v1075, %v1073
    %v1118 = vpack.c.b16 %v1078, %v1076
    %v1119 = vpack.c.b16 %v1079, %v1077
    %v1120 = vpack.c.b16 %v1082, %v1080
    %v1121 = vpack.c.b16 %v1083, %v1081
    %v1122 = vpack.c.b16 %v1086, %v1084
    %v1123 = vpack.c.b16 %v1087, %v1085
    %v1124 = vpack.c.b16 %v1090, %v1088
    %v1125 = vpack.c.b16 %v1091, %v1089
    %v1126 = vpack.c.b16 %v1094, %v1092
    %v1127 = vpack.c.b16 %v1095, %v1093
    %1160 = vmatprep.subr.bf16.mxu0 %v1111
    %1161 = vmatpush1.bf16.msra.mxu0 %v1110
    %1162 = vmatprep.subr.bf16.mxu0 %v1109
    %1163 = vmatpush1.bf16.msra.mxu0 %v1108
    %1164 = vmatprep.subr.bf16.mxu0 %v1107
    %1165 = vmatpush1.bf16.msra.mxu0 %v1106
    %1166 = vmatprep.subr.bf16.mxu0 %v1105
    %1167 = vmatpush1.bf16.msra.mxu0 %v1104
    %1168 = vmatprep.subr.bf16.mxu0 %v1103
    %1169 = vmatpush1.bf16.msra.mxu0 %v1102
    %1170 = vmatprep.subr.bf16.mxu0 %v1101
    %1171 = vmatpush1.bf16.msra.mxu0 %v1100
    %1172 = vmatprep.subr.bf16.mxu0 %v1099
    %1173 = vmatpush1.bf16.msra.mxu0 %v1098
    %1174 = vmatprep.subr.bf16.mxu0 %v1097
    %1175 = vmatpush1.bf16.msra.mxu0 %v1096
    %1176 = vmatprep.subr.bf16.mxu0 %v1127
    %1177 = vmatpush2.bf16.msra.mxu0 %v1126
    %1178 = vmatprep.subr.bf16.mxu0 %v1125
    %1179 = vmatpush2.bf16.msra.mxu0 %v1124
    %1180 = vmatprep.subr.bf16.mxu0 %v1123
    %1181 = vmatpush2.bf16.msra.mxu0 %v1122
    %1182 = vmatprep.subr.bf16.mxu0 %v1121
    %1183 = vmatpush2.bf16.msra.mxu0 %v1120
    %1184 = vmatprep.subr.bf16.mxu0 %v1119
    %1185 = vmatpush2.bf16.msra.mxu0 %v1118
    %1186 = vmatprep.subr.bf16.mxu0 %v1117
    %1187 = vmatpush2.bf16.msra.mxu0 %v1116
    %1188 = vmatprep.subr.bf16.mxu0 %v1115
    %1189 = vmatpush2.bf16.msra.mxu0 %v1114
    %1190 = vmatprep.subr.bf16.mxu0 %v1113
    %1191 = vmatpush2.bf16.msra.mxu0 %v1112
    %1192 = vmatprep.mubr.bf16.mxu0 %v955
    %1193 = vmatmul.mubr.bf16.gmra.mxu0 %v954
    %v1194 = vpop.f32.mrf.mxu0
    %v1195 = vadd.f32 %v993, %v1194
    %v1196 = vpop.f32.mrf.mxu0
    %v1197 = vadd.f32 %v997, %v1196
    %v1198 = vpop.f32.mrf.mxu0
    %v1199 = vpop.f32.mrf.mxu0
    %1200 = vdwg.mxu0
    %v1201 = vmax.f32 %v1195, 0.0
    %v1202 = vmax.f32 %v1197, 0.0
    %v1203 = vpack.c.bf16 %v1201, %v1201
    %v1204 = vpack.c.bf16 %v1202, %v1202
    %v1205 = vld [vmem:[#allocation7] sm:$0xff]
    %v1206 = vld [vmem:[#allocation7 + $0x8] sm:$0xff]
    %v1207 = vld [vmem:[#allocation7 + $0x10] sm:$0xff]
    %v1208 = vld [vmem:[#allocation7 + $0x18] sm:$0xff]
    %v1209 = vld [vmem:[#allocation7 + $0x20] sm:$0xff]
    %v1210 = vld [vmem:[#allocation7 + $0x28] sm:$0xff]
    %v1211 = vld [vmem:[#allocation7 + $0x30] sm:$0xff]
    %v1212 = vld [vmem:[#allocation7 + $0x38] sm:$0xff]
    %v1213 = vld [vmem:[#allocation7 + $0x40] sm:$0xff]
    %v1214 = vld [vmem:[#allocation7 + $0x48] sm:$0xff]
    %v1215 = vld [vmem:[#allocation7 + $0x50] sm:$0xff]
    %v1216 = vld [vmem:[#allocation7 + $0x58] sm:$0xff]
    %v1217 = vld [vmem:[#allocation7 + $0x60] sm:$0xff]
    %v1218 = vld [vmem:[#allocation7 + $0x68] sm:$0xff]
    %v1219 = vld [vmem:[#allocation7 + $0x70] sm:$0xff]
    %v1220 = vld [vmem:[#allocation7 + $0x78] sm:$0xff]
    %v1221 = vld [vmem:[#allocation7 + $0x80] sm:$0xff]
    %v1222 = vld [vmem:[#allocation7 + $0x88] sm:$0xff]
    %v1223 = vld [vmem:[#allocation7 + $0x90] sm:$0xff]
    %v1224 = vld [vmem:[#allocation7 + $0x98] sm:$0xff]
    %v1225 = vld [vmem:[#allocation7 + $0xa0] sm:$0xff]
    %v1226 = vld [vmem:[#allocation7 + $0xa8] sm:$0xff]
    %v1227 = vld [vmem:[#allocation7 + $0xb0] sm:$0xff]
    %v1228 = vld [vmem:[#allocation7 + $0xb8] sm:$0xff]
    %v1229 = vld [vmem:[#allocation7 + $0xc0] sm:$0xff]
    %v1230 = vld [vmem:[#allocation7 + $0xc8] sm:$0xff]
    %v1231 = vld [vmem:[#allocation7 + $0xd0] sm:$0xff]
    %v1232 = vld [vmem:[#allocation7 + $0xd8] sm:$0xff]
    %v1233 = vld [vmem:[#allocation7 + $0xe0] sm:$0xff]
    %v1234 = vld [vmem:[#allocation7 + $0xe8] sm:$0xff]
    %v1235 = vld [vmem:[#allocation7 + $0xf0] sm:$0xff]
    %v1236 = vld [vmem:[#allocation7 + $0xf8] sm:$0xff]
    %v1237 = vld [vmem:[%s6] sm:$0x3]
    %v1239 = vlaneseq
    %v1240 = vshrl.u32 %v1239, 7
    %v1241 = vsub.s32 0, %v1240
    %v1242 = vrot.slane %v1237, %v1241
    %v1243 = vlaneseq
    %v1244 = vshrl.u32 %v1243, 7
    %v1245 = vsub.s32 1, %v1244
    %v1246 = vrot.slane %v1237, %v1245
    %v1281 = vunpack.c.l.b16 %v1205
    %v1282 = vunpack.c.h.b16 %v1205
    %v1283 = vunpack.c.l.b16 %v1206
    %v1284 = vunpack.c.h.b16 %v1206
    %v1285 = vunpack.c.l.b16 %v1207
    %v1286 = vunpack.c.h.b16 %v1207
    %v1287 = vunpack.c.l.b16 %v1208
    %v1288 = vunpack.c.h.b16 %v1208
    %v1289 = vunpack.c.l.b16 %v1209
    %v1290 = vunpack.c.h.b16 %v1209
    %v1291 = vunpack.c.l.b16 %v1210
    %v1292 = vunpack.c.h.b16 %v1210
    %v1293 = vunpack.c.l.b16 %v1211
    %v1294 = vunpack.c.h.b16 %v1211
    %v1295 = vunpack.c.l.b16 %v1212
    %v1296 = vunpack.c.h.b16 %v1212
    %v1297 = vunpack.c.l.b16 %v1213
    %v1298 = vunpack.c.h.b16 %v1213
    %v1299 = vunpack.c.l.b16 %v1214
    %v1300 = vunpack.c.h.b16 %v1214
    %v1301 = vunpack.c.l.b16 %v1215
    %v1302 = vunpack.c.h.b16 %v1215
    %v1303 = vunpack.c.l.b16 %v1216
    %v1304 = vunpack.c.h.b16 %v1216
    %v1305 = vunpack.c.l.b16 %v1217
    %v1306 = vunpack.c.h.b16 %v1217
    %v1307 = vunpack.c.l.b16 %v1218
    %v1308 = vunpack.c.h.b16 %v1218
    %v1309 = vunpack.c.l.b16 %v1219
    %v1310 = vunpack.c.h.b16 %v1219
    %v1311 = vunpack.c.l.b16 %v1220
    %v1312 = vunpack.c.h.b16 %v1220
    %v1313 = vunpack.c.l.b16 %v1221
    %v1314 = vunpack.c.h.b16 %v1221
    %v1315 = vunpack.c.l.b16 %v1222
    %v1316 = vunpack.c.h.b16 %v1222
    %v1317 = vunpack.c.l.b16 %v1223
    %v1318 = vunpack.c.h.b16 %v1223
    %v1319 = vunpack.c.l.b16 %v1224
    %v1320 = vunpack.c.h.b16 %v1224
    %v1321 = vunpack.c.l.b16 %v1225
    %v1322 = vunpack.c.h.b16 %v1225
    %v1323 = vunpack.c.l.b16 %v1226
    %v1324 = vunpack.c.h.b16 %v1226
    %v1325 = vunpack.c.l.b16 %v1227
    %v1326 = vunpack.c.h.b16 %v1227
    %v1327 = vunpack.c.l.b16 %v1228
    %v1328 = vunpack.c.h.b16 %v1228
    %v1329 = vunpack.c.l.b16 %v1229
    %v1330 = vunpack.c.h.b16 %v1229
    %v1331 = vunpack.c.l.b16 %v1230
    %v1332 = vunpack.c.h.b16 %v1230
    %v1333 = vunpack.c.l.b16 %v1231
    %v1334 = vunpack.c.h.b16 %v1231
    %v1335 = vunpack.c.l.b16 %v1232
    %v1336 = vunpack.c.h.b16 %v1232
    %v1337 = vunpack.c.l.b16 %v1233
    %v1338 = vunpack.c.h.b16 %v1233
    %v1339 = vunpack.c.l.b16 %v1234
    %v1340 = vunpack.c.h.b16 %v1234
    %v1341 = vunpack.c.l.b16 %v1235
    %v1342 = vunpack.c.h.b16 %v1235
    %v1343 = vunpack.c.l.b16 %v1236
    %v1344 = vunpack.c.h.b16 %v1236
    %v1345 = vpack.c.b16 %v1283, %v1281
    %v1346 = vpack.c.b16 %v1284, %v1282
    %v1347 = vpack.c.b16 %v1287, %v1285
    %v1348 = vpack.c.b16 %v1288, %v1286
    %v1349 = vpack.c.b16 %v1291, %v1289
    %v1350 = vpack.c.b16 %v1292, %v1290
    %v1351 = vpack.c.b16 %v1295, %v1293
    %v1352 = vpack.c.b16 %v1296, %v1294
    %v1353 = vpack.c.b16 %v1299, %v1297
    %v1354 = vpack.c.b16 %v1300, %v1298
    %v1355 = vpack.c.b16 %v1303, %v1301
    %v1356 = vpack.c.b16 %v1304, %v1302
    %v1357 = vpack.c.b16 %v1307, %v1305
    %v1358 = vpack.c.b16 %v1308, %v1306
    %v1359 = vpack.c.b16 %v1311, %v1309
    %v1360 = vpack.c.b16 %v1312, %v1310
    %v1361 = vpack.c.b16 %v1315, %v1313
    %v1362 = vpack.c.b16 %v1316, %v1314
    %v1363 = vpack.c.b16 %v1319, %v1317
    %v1364 = vpack.c.b16 %v1320, %v1318
    %v1365 = vpack.c.b16 %v1323, %v1321
    %v1366 = vpack.c.b16 %v1324, %v1322
    %v1367 = vpack.c.b16 %v1327, %v1325
    %v1368 = vpack.c.b16 %v1328, %v1326
    %v1369 = vpack.c.b16 %v1331, %v1329
    %v1370 = vpack.c.b16 %v1332, %v1330
    %v1371 = vpack.c.b16 %v1335, %v1333
    %v1372 = vpack.c.b16 %v1336, %v1334
    %v1373 = vpack.c.b16 %v1339, %v1337
    %v1374 = vpack.c.b16 %v1340, %v1338
    %v1375 = vpack.c.b16 %v1343, %v1341
    %v1376 = vpack.c.b16 %v1344, %v1342
    %1409 = vmatprep.subr.bf16.mxu0 %v1360
    %1410 = vmatpush1.bf16.msra.mxu0 %v1359
    %1411 = vmatprep.subr.bf16.mxu0 %v1358
    %1412 = vmatpush1.bf16.msra.mxu0 %v1357
    %1413 = vmatprep.subr.bf16.mxu0 %v1356
    %1414 = vmatpush1.bf16.msra.mxu0 %v1355
    %1415 = vmatprep.subr.bf16.mxu0 %v1354
    %1416 = vmatpush1.bf16.msra.mxu0 %v1353
    %1417 = vmatprep.subr.bf16.mxu0 %v1352
    %1418 = vmatpush1.bf16.msra.mxu0 %v1351
    %1419 = vmatprep.subr.bf16.mxu0 %v1350
    %1420 = vmatpush1.bf16.msra.mxu0 %v1349
    %1421 = vmatprep.subr.bf16.mxu0 %v1348
    %1422 = vmatpush1.bf16.msra.mxu0 %v1347
    %1423 = vmatprep.subr.bf16.mxu0 %v1346
    %1424 = vmatpush1.bf16.msra.mxu0 %v1345
    %1425 = vmatprep.subr.bf16.mxu0 %v1376
    %1426 = vmatpush2.bf16.msra.mxu0 %v1375
    %1427 = vmatprep.subr.bf16.mxu0 %v1374
    %1428 = vmatpush2.bf16.msra.mxu0 %v1373
    %1429 = vmatprep.subr.bf16.mxu0 %v1372
    %1430 = vmatpush2.bf16.msra.mxu0 %v1371
    %1431 = vmatprep.subr.bf16.mxu0 %v1370
    %1432 = vmatpush2.bf16.msra.mxu0 %v1369
    %1433 = vmatprep.subr.bf16.mxu0 %v1368
    %1434 = vmatpush2.bf16.msra.mxu0 %v1367
    %1435 = vmatprep.subr.bf16.mxu0 %v1366
    %1436 = vmatpush2.bf16.msra.mxu0 %v1365
    %1437 = vmatprep.subr.bf16.mxu0 %v1364
    %1438 = vmatpush2.bf16.msra.mxu0 %v1363
    %1439 = vmatprep.subr.bf16.mxu0 %v1362
    %1440 = vmatpush2.bf16.msra.mxu0 %v1361
    %1441 = vmatprep.mubr.bf16.mxu0 %v1204
    %1442 = vmatmul.mubr.bf16.gmra.mxu0 %v1203
    %v1443 = vpop.f32.mrf.mxu0
    %v1444 = vadd.f32 %v1242, %v1443
    %v1445 = vpop.f32.mrf.mxu0
    %v1446 = vadd.f32 %v1246, %v1445
    %v1447 = vpop.f32.mrf.mxu0
    %v1448 = vpop.f32.mrf.mxu0
    %1449 = vdwg.mxu0
    %v1450 = vmax.f32 %v1444, 0.0
    %v1451 = vmax.f32 %v1446, 0.0
    %v1452 = vpack.c.bf16 %v1450, %v1450
    %v1453 = vpack.c.bf16 %v1451, %v1451
    %v1454 = vld [vmem:[%s7] sm:$0xf]
    %v1455 = vld [vmem:[%s7 + $0x4] sm:$0xf]
    %v1456 = vld [vmem:[%s7 + $0x8] sm:$0xf]
    %v1457 = vld [vmem:[%s7 + $0xc] sm:$0xf]
    %v1458 = vld [vmem:[%s7 + $0x10] sm:$0xf]
    %v1459 = vld [vmem:[%s7 + $0x14] sm:$0xf]
    %v1460 = vld [vmem:[%s7 + $0x18] sm:$0xf]
    %v1461 = vld [vmem:[%s7 + $0x1c] sm:$0xf]
    %v1462 = vld [vmem:[%s7 + $0x20] sm:$0xf]
    %v1463 = vld [vmem:[%s7 + $0x24] sm:$0xf]
    %v1464 = vld [vmem:[%s7 + $0x28] sm:$0xf]
    %v1465 = vld [vmem:[%s7 + $0x2c] sm:$0xf]
    %v1466 = vld [vmem:[%s7 + $0x30] sm:$0xf]
    %v1467 = vld [vmem:[%s7 + $0x34] sm:$0xf]
    %v1468 = vld [vmem:[%s7 + $0x38] sm:$0xf]
    %v1469 = vld [vmem:[%s7 + $0x3c] sm:$0xf]
    %v1470 = vld [vmem:[%s7 + $0x40] sm:$0xf]
    %v1471 = vld [vmem:[%s7 + $0x44] sm:$0xf]
    %v1472 = vld [vmem:[%s7 + $0x48] sm:$0xf]
    %v1473 = vld [vmem:[%s7 + $0x4c] sm:$0xf]
    %v1474 = vld [vmem:[%s7 + $0x50] sm:$0xf]
    %v1475 = vld [vmem:[%s7 + $0x54] sm:$0xf]
    %v1476 = vld [vmem:[%s7 + $0x58] sm:$0xf]
    %v1477 = vld [vmem:[%s7 + $0x5c] sm:$0xf]
    %v1478 = vld [vmem:[%s7 + $0x60] sm:$0xf]
    %v1479 = vld [vmem:[%s7 + $0x64] sm:$0xf]
    %v1480 = vld [vmem:[%s7 + $0x68] sm:$0xf]
    %v1481 = vld [vmem:[%s7 + $0x6c] sm:$0xf]
    %v1482 = vld [vmem:[%s7 + $0x70] sm:$0xf]
    %v1483 = vld [vmem:[%s7 + $0x74] sm:$0xf]
    %v1484 = vld [vmem:[%s7 + $0x78] sm:$0xf]
    %v1485 = vld [vmem:[%s7 + $0x7c] sm:$0xf]
    %v1486 = vld [vmem:[%s8] sm:$0x1]
    %v1488 = vlaneseq
    %v1489 = vshrl.u32 %v1488, 7
    %v1490 = vsub.s32 0, %v1489
    %v1491 = vrot.slane %v1486, %v1490
    %v1525 = vunpack.c.l.b16 %v1454
    %v1526 = vunpack.c.l.b16 %v1455
    %v1527 = vunpack.c.l.b16 %v1456
    %v1528 = vunpack.c.l.b16 %v1457
    %v1529 = vunpack.c.l.b16 %v1458
    %v1530 = vunpack.c.l.b16 %v1459
    %v1531 = vunpack.c.l.b16 %v1460
    %v1532 = vunpack.c.l.b16 %v1461
    %v1533 = vunpack.c.l.b16 %v1462
    %v1534 = vunpack.c.l.b16 %v1463
    %v1535 = vunpack.c.l.b16 %v1464
    %v1536 = vunpack.c.l.b16 %v1465
    %v1537 = vunpack.c.l.b16 %v1466
    %v1538 = vunpack.c.l.b16 %v1467
    %v1539 = vunpack.c.l.b16 %v1468
    %v1540 = vunpack.c.l.b16 %v1469
    %v1541 = vunpack.c.l.b16 %v1470
    %v1542 = vunpack.c.l.b16 %v1471
    %v1543 = vunpack.c.l.b16 %v1472
    %v1544 = vunpack.c.l.b16 %v1473
    %v1545 = vunpack.c.l.b16 %v1474
    %v1546 = vunpack.c.l.b16 %v1475
    %v1547 = vunpack.c.l.b16 %v1476
    %v1548 = vunpack.c.l.b16 %v1477
    %v1549 = vunpack.c.l.b16 %v1478
    %v1550 = vunpack.c.l.b16 %v1479
    %v1551 = vunpack.c.l.b16 %v1480
    %v1552 = vunpack.c.l.b16 %v1481
    %v1553 = vunpack.c.l.b16 %v1482
    %v1554 = vunpack.c.l.b16 %v1483
    %v1555 = vunpack.c.l.b16 %v1484
    %v1556 = vunpack.c.l.b16 %v1485
    %v1557 = vpack.c.b16 %v1526, %v1525
    %v1558 = vpack.c.b16 %v1528, %v1527
    %v1559 = vpack.c.b16 %v1530, %v1529
    %v1560 = vpack.c.b16 %v1532, %v1531
    %v1561 = vpack.c.b16 %v1534, %v1533
    %v1562 = vpack.c.b16 %v1536, %v1535
    %v1563 = vpack.c.b16 %v1538, %v1537
    %v1564 = vpack.c.b16 %v1540, %v1539
    %v1565 = vpack.c.b16 %v1542, %v1541
    %v1566 = vpack.c.b16 %v1544, %v1543
    %v1567 = vpack.c.b16 %v1546, %v1545
    %v1568 = vpack.c.b16 %v1548, %v1547
    %v1569 = vpack.c.b16 %v1550, %v1549
    %v1570 = vpack.c.b16 %v1552, %v1551
    %v1571 = vpack.c.b16 %v1554, %v1553
    %v1572 = vpack.c.b16 %v1556, %v1555
    %1589 = vmatprep.subr.bf16.mxu0 0
    %1590 = vmatpush1.bf16.msra.mxu0 %v1564
    %1591 = vmatprep.subr.bf16.mxu0 0
    %1592 = vmatpush1.bf16.msra.mxu0 %v1563
    %1593 = vmatprep.subr.bf16.mxu0 0
    %1594 = vmatpush1.bf16.msra.mxu0 %v1562
    %1595 = vmatprep.subr.bf16.mxu0 0
    %1596 = vmatpush1.bf16.msra.mxu0 %v1561
    %1597 = vmatprep.subr.bf16.mxu0 0
    %1598 = vmatpush1.bf16.msra.mxu0 %v1560
    %1599 = vmatprep.subr.bf16.mxu0 0
    %1600 = vmatpush1.bf16.msra.mxu0 %v1559
    %1601 = vmatprep.subr.bf16.mxu0 0
    %1602 = vmatpush1.bf16.msra.mxu0 %v1558
    %1603 = vmatprep.subr.bf16.mxu0 0
    %1604 = vmatpush1.bf16.msra.mxu0 %v1557
    %1605 = vmatprep.subr.bf16.mxu0 0
    %1606 = vmatpush2.bf16.msra.mxu0 %v1572
    %1607 = vmatprep.subr.bf16.mxu0 0
    %1608 = vmatpush2.bf16.msra.mxu0 %v1571
    %1609 = vmatprep.subr.bf16.mxu0 0
    %1610 = vmatpush2.bf16.msra.mxu0 %v1570
    %1611 = vmatprep.subr.bf16.mxu0 0
    %1612 = vmatpush2.bf16.msra.mxu0 %v1569
    %1613 = vmatprep.subr.bf16.mxu0 0
    %1614 = vmatpush2.bf16.msra.mxu0 %v1568
    %1615 = vmatprep.subr.bf16.mxu0 0
    %1616 = vmatpush2.bf16.msra.mxu0 %v1567
    %1617 = vmatprep.subr.bf16.mxu0 0
    %1618 = vmatpush2.bf16.msra.mxu0 %v1566
    %1619 = vmatprep.subr.bf16.mxu0 0
    %1620 = vmatpush2.bf16.msra.mxu0 %v1565
    %1621 = vmatprep.mubr.bf16.mxu0 %v1453
    %1622 = vmatmul.mubr.bf16.gmra.mxu0 %v1452
    %v1623 = vpop.f32.mrf.mxu0
    %v1624 = vadd.f32 %v1491, %v1623
    %v1625 = vpop.f32.mrf.mxu0
    %v1626 = vpop.f32.mrf.mxu0
    %v1627 = vpop.f32.mrf.mxu0
    %1628 = vdwg.mxu0
    %vm1629 = vcmask 80896
    %v1630 = vsel %vm1629, %v1624, -inf
    %1631 = vmax.xlane.f32.xlu0 %v1630
    %v1632 = vpop.xlane.xlu0 %1631
    %v1633 = vsub.f32 %v1624, %v1632
    %v1634 = vmul.f32 %v1633, 1.442695
    %v1635 = vpow.pop %v1634
    %v1636 = vsel %vm1629, %v1635, 0.0
    %1637 = vadd.xlane.f32.xlu0 %v1636
    %v1638 = vpop.xlane.xlu0 %1637
    %v1639 = vlog2.pop %v1638
    %v1640 = vmul.f32 %v1639, 0.6931472
    %v1641 = vsub.f32 %v1633, %v1640
    %1642 = vst.msk [vmem:[#allocation8] sm:$0xff] %vm1629, %v1641
    // Predicated region
    $region50: #{tpu_custom_call.1} parent=1 // pred_check
      _
    $region51: #{tpu_custom_call.1} parent=1 // pred_check_branch
      %1644 = sbr.rel (0) target = $region53
    $region52: #{tpu_custom_call.1} parent=1 // pred_region
      %s1646 = ssub.s32 128, 128
      %1647 = vsyncadd [#allocation4], %s1646
      %s1649 = sshll.u32 [#allocation8], 4
      %s1650 = int_to_ptr.vmem [resolvable:$true] %s1649
      %1652 = dma.vmem_to_hbm [thread:$0]  %s1650, 128, %s9, [#allocation4]
    $region53: #{tpu_custom_call.1} parent=1 // pred_fallthru
      _
    // Predicated region
    $region54: #{tpu_custom_call.1} parent=1 // pred_check
      _
    $region55: #{tpu_custom_call.1} parent=1 // pred_check_branch
      %1654 = sbr.rel (0) target = $region57
    $region56: #{tpu_custom_call.1} parent=1 // pred_region
      %1655 = dma.done [#allocation4], 128
    $region57: #{tpu_custom_call.1} parent=1 // pred_fallthru
      _
    %1656 = vsyncpa [#allocation3], 1
    %1657 = vsyncpa [#allocation6], 1
    %1658 = vsyncpa [#allocation4], 1

</llo_original>
